<compile_context>
chip_gen: v7x
topology: tpu7x:2x2x1
jax: 0.10.0
libtpu: 0.0.40
codegen_flags: <defaults>
</compile_context>

<pallas_src>
import jax
import jax.numpy as jnp
import numpy as np
from jax.experimental import pallas as pl
from jax.experimental.pallas import tpu as pltpu

NC_PAD = 128          # lane-dense padded class dimension
NEG_INF = -1e30       # padded-class bias -> exp() == 0 in the softmax denominator


# --------------------------------------------------------------------------- host-side weight packing
def pack_params(params, input_size):
    """Repack HWIO conv weights into per-kernel-row block-Toeplitz matrices that read the
    packed-lane activation layout, tile biases over W, and build a lane-mapped, class-padded
    linear weight.  Pure host-side numpy; runs once."""
    convs = [(np.asarray(w, np.float32), np.asarray(b, np.float32)) for (w, b) in params["convs"]]
    lin_w = np.asarray(params["lin_w"], np.float32)
    lin_b = np.asarray(params["lin_b"], np.float32)

    KH, KW = convs[0][0].shape[0], convs[0][0].shape[1]
    assert KH == 3 and KW == 3, "packed-lane kernel assumes kernel_size=3, padding=1"

    layer_cfgs, packed = [], []
    H = W = input_size
    Cin = convs[0][0].shape[2]
    in_lane = lambda w, ci, C=Cin: w * C + ci            # layer-1 input: dense (H, W*C) slab
    Win = W * Cin
    for (wt, b) in convs:
        assert wt.shape[2] == Cin
        assert H % 2 == 0 and W % 2 == 0, "2x2 MaxPool path assumes even conv output size"
        Cout = wt.shape[3]
        Wout = W * Cout                                   # dense conv-output lane width
        T = np.zeros((KH, Win, Wout), np.float32)
        for kh in range(KH):
            for w in range(W):
                for kw in range(KW):
                    wi = w + kw - 1                       # padding = 1
                    if 0 <= wi < W:                       # horizontal zero-pad absorbed by omission
                        for ci in range(Cin):
                            T[kh, in_lane(wi, ci), w * Cout:(w + 1) * Cout] += wt[kh, kw, ci, :]
        brow = np.tile(b.reshape(1, Cout), (1, W))        # bias replicated at lane w*Cout + c
        Wd = (W - 1) * Cout                               # width after horizontal pool (even bands valid)
        layer_cfgs.append(dict(H=H, W=W, Cout=Cout, Win=Win, Wout=Wout, Wd=Wd))
        packed += [T, brow]
        # next layer's logical dims + its (uncompacted, even-band) input lane map
        H, W, Cin, Win = H // 2, W // 2, Cout, Wd
        in_lane = lambda w, ci, C=Cout: 2 * w * C + ci

    # Final linear: features indexed (ho, wo, c) in NHWC flatten order, read from the last
    # layer's pooled slab at sublane row ho and lane 2*wo*C + c; classes padded to 128 lanes.
    H3, W3, C3 = H, W, Cin
    Wd3 = layer_cfgs[-1]["Wd"]
    num_classes = lin_w.shape[1]
    assert lin_w.shape[0] == H3 * W3 * C3
    WL = np.zeros((H3, Wd3, NC_PAD), np.float32)
    for ho in range(H3):
        for wo in range(W3):
            for c in range(C3):
                WL[ho, 2 * wo * C3 + c, :num_classes] = lin_w[(ho * W3 + wo) * C3 + c, :]
    bL = np.full((1, NC_PAD), NEG_INF, np.float32)
    bL[0, :num_classes] = lin_b.reshape(-1)

    weights = [jnp.asarray(a) for a in packed + [WL, bL]]
    return layer_cfgs, weights


# --------------------------------------------------------------------------- fused forward pass
def build_net_forward(layer_cfgs, N, num_classes, batch_block=8):
    """Returns a jitted forward(x, *packed_weights) -> (N, num_classes) log-probabilities."""
    KH = 3
    NB = N if N < batch_block else batch_block            # images per grid step
    assert N % NB == 0, "batch must be divisible by the batch tile"
    cfg1, cfg3 = layer_cfgs[0], layer_cfgs[-1]
    H1, W1, Win1 = cfg1["H"], cfg1["W"], cfg1["Win"]
    Cin1 = Win1 // W1
    H3, Ho3 = cfg3["H"], cfg3["H"] // 2

    def kernel(x_ref, t1, b1, t2, b2, t3, b3, wl, bl, o_ref,
               pad1, pad2, pad3, hb1, hb2, hb3):
        t_refs, b_refs = (t1, t2, t3), (b1, b2, b3)
        pad_refs, hb_refs = (pad1, pad2, pad3), (hb1, hb2, hb3)

        # Vertical zero-padding rows only (horizontal padding lives inside the Toeplitz weights).
        # Re-zeroed every step (2 tiny row stores per layer) so the batch axis is safely "parallel".
        for li, cfg in enumerate(layer_cfgs):
            z = jnp.zeros((NB, 1, cfg["Win"]), jnp.float32)
            pad_refs[li][:, pl.ds(0, 1), :] = z
            pad_refs[li][:, pl.ds(cfg["H"] + 1, 1), :] = z

        # Layer-1 input slab -> interior rows of its padded scratch (single lane-dense store).
        pad_refs[0][:, pl.ds(1, H1), :] = x_ref[...]

        for li, cfg in enumerate(layer_cfgs):
            H, Cout = cfg["H"], cfg["Cout"]
            Win, Wout, Wd = cfg["Win"], cfg["Wout"], cfg["Wd"]
            Ho = H // 2
            pr, hb = pad_refs[li], hb_refs[li]

            # Conv(k=3, pad=1) == 3 lane-dense matmuls against block-Toeplitz weights.
            acc = None
            for kh in range(KH):
                rows = pr[:, pl.ds(kh, H), :].reshape(NB * H, Win)
                contrib = jnp.dot(rows, t_refs[li][kh], preferred_element_type=jnp.float32)
                acc = contrib if acc is None else acc + contrib
            acts = jnp.maximum(acc + b_refs[li][...], 0.0)           # (NB*H, W*Cout)

            # Horizontal 2x max-pool: lane shift + max; valid results stay at even lane bands
            # (the next layer's weights read those bands directly -> no lane compaction).
            hb[...] = jnp.maximum(acts[:, :Wd], acts[:, Cout:])      # (NB*H, Wd)

            if li + 1 < len(layer_cfgs):
                # Vertical 2x max-pool: even/odd sublane rows via strided reads.
                pooled = jnp.maximum(hb[pl.ds(0, NB * Ho, stride=2), :],
                                     hb[pl.ds(1, NB * Ho, stride=2), :])
                pad_refs[li + 1][:, pl.ds(1, Ho), :] = pooled.reshape(NB, Ho, Wd)

        # Flatten + Dropout (eval-mode identity) + Linear + LogSoftmax.
        # The last layer's vertical pool is fused into the per-row linear dots.
        hb3 = hb_refs[-1]
        lg = None
        for ho in range(Ho3):
            feats = jnp.maximum(hb3[pl.ds(2 * ho, NB, stride=H3), :],
                                hb3[pl.ds(2 * ho + 1, NB, stride=H3), :])    # (NB, Wd3)
            contrib = jnp.dot(feats, wl[ho], preferred_element_type=jnp.float32)
            lg = contrib if lg is None else lg + contrib
        logits = lg + bl[...]                                        # (NB, 128) lane-dense
        m = jnp.max(logits, axis=-1, keepdims=True)
        s = logits - m
        o_ref[...] = s - jnp.log(jnp.sum(jnp.exp(s), axis=-1, keepdims=True))

    whole = lambda shape: pl.BlockSpec(shape, lambda i: (0,) * len(shape))
    in_specs = [pl.BlockSpec((NB, H1, Win1), lambda i: (i, 0, 0))]
    for cfg in layer_cfgs:
        in_specs += [whole((KH, cfg["Win"], cfg["Wout"])), whole((1, cfg["Wout"]))]
    in_specs += [whole((Ho3, cfg3["Wd"], NC_PAD)), whole((1, NC_PAD))]

    scratch = ([pltpu.VMEM((NB, cfg["H"] + 2, cfg["Win"]), jnp.float32) for cfg in layer_cfgs]
               + [pltpu.VMEM((NB * cfg["H"], cfg["Wd"]), jnp.float32) for cfg in layer_cfgs])

    call = pl.pallas_call(
        kernel,
        out_shape=jax.ShapeDtypeStruct((N, NC_PAD), jnp.float32),
        grid_spec=pltpu.PrefetchScalarGridSpec(
            num_scalar_prefetch=0,
            grid=(N // NB,),
            in_specs=in_specs,
            out_specs=pl.BlockSpec((NB, NC_PAD), lambda i: (i, 0)),
            scratch_shapes=scratch),
        compiler_params=pltpu.CompilerParams(
            dimension_semantics=("parallel",),            # v7x: shard batch tiles over both TCs
            vmem_limit_bytes=32 * 1024 * 1024),
    )

    @jax.jit
    def forward(x, *weights):
        xs = x.reshape(N, H1, W1 * Cin1)                  # NHWC -> lane-dense (N, H, W*C) slab
        return call(xs, *weights)[:, :num_classes]

    return forward


# --------------------------------------------------------------------------- pure-JAX reference
def ref_forward(x, params):
    """Pure-JAX reference with identical semantics (NHWC)."""
    y = x
    for (w, b) in params["convs"]:
        y = jax.lax.conv_general_dilated(
            y, w, window_strides=(1, 1), padding=((1, 1), (1, 1)),
            dimension_numbers=("NHWC", "HWIO", "NHWC"),
            precision=jax.lax.Precision.HIGHEST)
        y = jnp.maximum(y + b.reshape(1, 1, 1, -1), 0.0)
        y = jax.lax.reduce_window(y, -jnp.inf, jax.lax.max,
                                  (1, 2, 2, 1), (1, 2, 2, 1), "VALID")
    feats = y.reshape(y.shape[0], -1)
    logits = jnp.dot(feats, params["lin_w"],
                     precision=jax.lax.Precision.HIGHEST) + params["lin_b"]
    return jax.nn.log_softmax(logits, axis=1)


if __name__ == "__main__":
    # Small hyperparameters consistent with Net(num_filters*, kernel_size=3, ..., input_size=16)
    num_filters1, num_filters2, num_filters3 = 8, 8, 8
    kernel_size, num_classes, input_size = 3, 10, 16
    batch = 2

    key = jax.random.PRNGKey(0)
    ks = jax.random.split(key, 9)

    def init(k, shape, scale=0.1):
        return scale * jax.random.normal(k, shape, jnp.float32)

    convs = [
        (init(ks[0], (kernel_size, kernel_size, 3, num_filters1)),
         init(ks[1], (1, num_filters1))),
        (init(ks[2], (kernel_size, kernel_size, num_filters1, num_filters2)),
         init(ks[3], (1, num_filters2))),
        (init(ks[4], (kernel_size, kernel_size, num_filters2, num_filters3)),
         init(ks[5], (1, num_filters3))),
    ]

    # Same output-size arithmetic as the PyTorch __init__
    out_spatial = input_size
    for _ in range(3):
        out_spatial = (out_spatial - kernel_size + 2 * 1) // 1 + 1
        out_spatial = out_spatial // 2
    feat_dim = out_spatial * out_spatial * num_filters3   # 2*2*8 = 32

    params = {
        "convs": convs,
        "lin_w": init(ks[6], (feat_dim, num_classes)),
        "lin_b": init(ks[7], (1, num_classes)),
    }

    x = jax.random.normal(ks[8], (batch, input_size, input_size, 3), jnp.float32)

    layer_cfgs, packed_weights = pack_params(params, input_size)
    net_forward = build_net_forward(layer_cfgs, N=batch, num_classes=num_classes)

    out = jax.block_until_ready(net_forward(x, *packed_weights))
    ref = jax.block_until_ready(ref_forward(x, params))
    assert out.shape == (batch, num_classes)
    np.testing.assert_allclose(np.asarray(out), np.asarray(ref), rtol=1e-3, atol=1e-3)
    print("KERNEL_OK")
</pallas_src>

<mosaic_0001>
module attributes {stable_mosaic.version = 11 : i64} {
  func.func @kernel(%arg0: i32, %arg1: memref<2x16x48xf32, #tpu.memory_space<vmem>>, %arg2: memref<3x48x128xf32, #tpu.memory_space<vmem>>, %arg3: memref<1x128xf32, #tpu.memory_space<vmem>>, %arg4: memref<3x120x64xf32, #tpu.memory_space<vmem>>, %arg5: memref<1x64xf32, #tpu.memory_space<vmem>>, %arg6: memref<3x56x32xf32, #tpu.memory_space<vmem>>, %arg7: memref<1x32xf32, #tpu.memory_space<vmem>>, %arg8: memref<2x24x128xf32, #tpu.memory_space<vmem>>, %arg9: memref<1x128xf32, #tpu.memory_space<vmem>>, %arg10: memref<2x128xf32, #tpu.memory_space<vmem>>, %arg11: memref<2x18x48xf32, #tpu.memory_space<vmem>>, %arg12: memref<2x10x120xf32, #tpu.memory_space<vmem>>, %arg13: memref<2x6x56xf32, #tpu.memory_space<vmem>>, %arg14: memref<32x120xf32, #tpu.memory_space<vmem>>, %arg15: memref<16x56xf32, #tpu.memory_space<vmem>>, %arg16: memref<8x24xf32, #tpu.memory_space<vmem>>) attributes {dimension_semantics = [#tpu.dimension_semantics<parallel>], iteration_bounds = array<i64: 1>, scalar_prefetch = 0 : i64, scratch_operands = 6 : i64, tpu.core_type = #tpu.core_type<tc>, window_params = [{transform_indices = @transform_0, window_bounds = array<i64: 2, 16, 48>}, {pipeline_mode = #tpu.pipeline_mode<synchronous>, transform_indices = @transform_1, window_bounds = array<i64: 3, 48, 128>}, {pipeline_mode = #tpu.pipeline_mode<synchronous>, transform_indices = @transform_2, window_bounds = array<i64: 1, 128>}, {pipeline_mode = #tpu.pipeline_mode<synchronous>, transform_indices = @transform_3, window_bounds = array<i64: 3, 120, 64>}, {pipeline_mode = #tpu.pipeline_mode<synchronous>, transform_indices = @transform_4, window_bounds = array<i64: 1, 64>}, {pipeline_mode = #tpu.pipeline_mode<synchronous>, transform_indices = @transform_5, window_bounds = array<i64: 3, 56, 32>}, {pipeline_mode = #tpu.pipeline_mode<synchronous>, transform_indices = @transform_6, window_bounds = array<i64: 1, 32>}, {pipeline_mode = #tpu.pipeline_mode<synchronous>, transform_indices = @transform_7, window_bounds = array<i64: 2, 24, 128>}, {pipeline_mode = #tpu.pipeline_mode<synchronous>, transform_indices = @transform_8, window_bounds = array<i64: 1, 128>}, {transform_indices = @transform_9, window_bounds = array<i64: 2, 128>}]} {
    %cst = arith.constant 0.000000e+00 : f32
    %0 = vector.broadcast %cst : f32 to vector<2x1x48xf32>
    %c0 = arith.constant 0 : index
    %c0_0 = arith.constant 0 : index
    %c0_1 = arith.constant 0 : index
    %1 = vector.load %arg11[%c0, %c0_0, %c0_1] : memref<2x18x48xf32, #tpu.memory_space<vmem>>, vector<2x1x48xf32>
    tpu.vector_store %arg11[%c0, %c0_0, %c0_1], %0 {strides = array<i32>} : memref<2x18x48xf32, #tpu.memory_space<vmem>>, vector<2x1x48xf32>,
    %c0_2 = arith.constant 0 : index
    %c17 = arith.constant 17 : index
    %c0_3 = arith.constant 0 : index
    %2 = vector.load %arg11[%c0_2, %c17, %c0_3] : memref<2x18x48xf32, #tpu.memory_space<vmem>>, vector<2x1x48xf32>
    tpu.vector_store %arg11[%c0_2, %c17, %c0_3], %0 {strides = array<i32>} : memref<2x18x48xf32, #tpu.memory_space<vmem>>, vector<2x1x48xf32>,
    %cst_4 = arith.constant 0.000000e+00 : f32
    %3 = vector.broadcast %cst_4 : f32 to vector<2x1x120xf32>
    %c0_5 = arith.constant 0 : index
    %c0_6 = arith.constant 0 : index
    %c0_7 = arith.constant 0 : index
    %4 = vector.load %arg12[%c0_5, %c0_6, %c0_7] : memref<2x10x120xf32, #tpu.memory_space<vmem>>, vector<2x1x120xf32>
    tpu.vector_store %arg12[%c0_5, %c0_6, %c0_7], %3 {strides = array<i32>} : memref<2x10x120xf32, #tpu.memory_space<vmem>>, vector<2x1x120xf32>,
    %c0_8 = arith.constant 0 : index
    %c9 = arith.constant 9 : index
    %c0_9 = arith.constant 0 : index
    %5 = vector.load %arg12[%c0_8, %c9, %c0_9] : memref<2x10x120xf32, #tpu.memory_space<vmem>>, vector<2x1x120xf32>
    tpu.vector_store %arg12[%c0_8, %c9, %c0_9], %3 {strides = array<i32>} : memref<2x10x120xf32, #tpu.memory_space<vmem>>, vector<2x1x120xf32>,
    %cst_10 = arith.constant 0.000000e+00 : f32
    %6 = vector.broadcast %cst_10 : f32 to vector<2x1x56xf32>
    %c0_11 = arith.constant 0 : index
    %c0_12 = arith.constant 0 : index
    %c0_13 = arith.constant 0 : index
    %7 = vector.load %arg13[%c0_11, %c0_12, %c0_13] : memref<2x6x56xf32, #tpu.memory_space<vmem>>, vector<2x1x56xf32>
    tpu.vector_store %arg13[%c0_11, %c0_12, %c0_13], %6 {strides = array<i32>} : memref<2x6x56xf32, #tpu.memory_space<vmem>>, vector<2x1x56xf32>,
    %c0_14 = arith.constant 0 : index
    %c5 = arith.constant 5 : index
    %c0_15 = arith.constant 0 : index
    %8 = vector.load %arg13[%c0_14, %c5, %c0_15] : memref<2x6x56xf32, #tpu.memory_space<vmem>>, vector<2x1x56xf32>
    tpu.vector_store %arg13[%c0_14, %c5, %c0_15], %6 {strides = array<i32>} : memref<2x6x56xf32, #tpu.memory_space<vmem>>, vector<2x1x56xf32>,
    %c0_16 = arith.constant 0 : index
    %c0_17 = arith.constant 0 : index
    %c0_18 = arith.constant 0 : index
    %9 = vector.load %arg1[%c0_16, %c0_17, %c0_18] : memref<2x16x48xf32, #tpu.memory_space<vmem>>, vector<2x16x48xf32>
    %c0_19 = arith.constant 0 : index
    %c1 = arith.constant 1 : index
    %c0_20 = arith.constant 0 : index
    %10 = vector.load %arg11[%c0_19, %c1, %c0_20] : memref<2x18x48xf32, #tpu.memory_space<vmem>>, vector<2x16x48xf32>
    tpu.vector_store %arg11[%c0_19, %c1, %c0_20], %9 {strides = array<i32>} : memref<2x18x48xf32, #tpu.memory_space<vmem>>, vector<2x16x48xf32>,
    %c0_21 = arith.constant 0 : index
    %c0_22 = arith.constant 0 : index
    %c0_23 = arith.constant 0 : index
    %11 = vector.load %arg11[%c0_21, %c0_22, %c0_23] : memref<2x18x48xf32, #tpu.memory_space<vmem>>, vector<2x16x48xf32>
    %12 = vector.shape_cast %11 : vector<2x16x48xf32> to vector<32x48xf32>
    %c0_24 = arith.constant 0 : index
    %c0_25 = arith.constant 0 : index
    %c0_26 = arith.constant 0 : index
    %13 = vector.load %arg2[%c0_24, %c0_25, %c0_26] : memref<3x48x128xf32, #tpu.memory_space<vmem>>, vector<1x48x128xf32>
    %14 = vector.shape_cast %13 : vector<1x48x128xf32> to vector<48x128xf32>
    %cst_27 = arith.constant dense<0.000000e+00> : vector<32x128xf32>
    %15 = tpu.matmul %12, %14, %cst_27 {dimension_numbers = #tpu.dot_dimension_numbers<[1], [0], [0], [1], [0, 0, 1, 1], [], []>} : vector<32x48xf32>, vector<48x128xf32>, vector<32x128xf32> -> vector<32x128xf32>
    %c0_28 = arith.constant 0 : index
    %c1_29 = arith.constant 1 : index
    %c0_30 = arith.constant 0 : index
    %16 = vector.load %arg11[%c0_28, %c1_29, %c0_30] : memref<2x18x48xf32, #tpu.memory_space<vmem>>, vector<2x16x48xf32>
    %17 = vector.shape_cast %16 : vector<2x16x48xf32> to vector<32x48xf32>
    %c1_31 = arith.constant 1 : index
    %c0_32 = arith.constant 0 : index
    %c0_33 = arith.constant 0 : index
    %18 = vector.load %arg2[%c1_31, %c0_32, %c0_33] : memref<3x48x128xf32, #tpu.memory_space<vmem>>, vector<1x48x128xf32>
    %19 = vector.shape_cast %18 : vector<1x48x128xf32> to vector<48x128xf32>
    %cst_34 = arith.constant dense<0.000000e+00> : vector<32x128xf32>
    %20 = tpu.matmul %17, %19, %cst_34 {dimension_numbers = #tpu.dot_dimension_numbers<[1], [0], [0], [1], [0, 0, 1, 1], [], []>} : vector<32x48xf32>, vector<48x128xf32>, vector<32x128xf32> -> vector<32x128xf32>
    %21 = arith.addf %15, %20 : vector<32x128xf32>
    %c0_35 = arith.constant 0 : index
    %c2 = arith.constant 2 : index
    %c0_36 = arith.constant 0 : index
    %22 = vector.load %arg11[%c0_35, %c2, %c0_36] : memref<2x18x48xf32, #tpu.memory_space<vmem>>, vector<2x16x48xf32>
    %23 = vector.shape_cast %22 : vector<2x16x48xf32> to vector<32x48xf32>
    %c2_37 = arith.constant 2 : index
    %c0_38 = arith.constant 0 : index
    %c0_39 = arith.constant 0 : index
    %24 = vector.load %arg2[%c2_37, %c0_38, %c0_39] : memref<3x48x128xf32, #tpu.memory_space<vmem>>, vector<1x48x128xf32>
    %25 = vector.shape_cast %24 : vector<1x48x128xf32> to vector<48x128xf32>
    %cst_40 = arith.constant dense<0.000000e+00> : vector<32x128xf32>
    %26 = tpu.matmul %23, %25, %cst_40 {dimension_numbers = #tpu.dot_dimension_numbers<[1], [0], [0], [1], [0, 0, 1, 1], [], []>} : vector<32x48xf32>, vector<48x128xf32>, vector<32x128xf32> -> vector<32x128xf32>
    %27 = arith.addf %21, %26 : vector<32x128xf32>
    %c0_41 = arith.constant 0 : index
    %c0_42 = arith.constant 0 : index
    %28 = vector.load %arg3[%c0_41, %c0_42] : memref<1x128xf32, #tpu.memory_space<vmem>>, vector<1x128xf32>
    %29 = vector.broadcast %28 : vector<1x128xf32> to vector<32x128xf32>
    %30 = arith.addf %27, %29 : vector<32x128xf32>
    %cst_43 = arith.constant 0.000000e+00 : f32
    %31 = vector.broadcast %cst_43 : f32 to vector<32x128xf32>
    %32 = arith.maximumf %30, %31 : vector<32x128xf32>
    %33 = vector.extract_strided_slice %32 {offsets = [0, 0], sizes = [32, 120], strides = [1, 1]} : vector<32x128xf32> to vector<32x120xf32>
    %34 = vector.extract_strided_slice %32 {offsets = [0, 8], sizes = [32, 120], strides = [1, 1]} : vector<32x128xf32> to vector<32x120xf32>
    %35 = arith.maximumf %33, %34 : vector<32x120xf32>
    %c0_44 = arith.constant 0 : index
    %c0_45 = arith.constant 0 : index
    %36 = vector.load %arg14[%c0_44, %c0_45] : memref<32x120xf32, #tpu.memory_space<vmem>>, vector<32x120xf32>
    tpu.vector_store %arg14[%c0_44, %c0_45], %35 {strides = array<i32>} : memref<32x120xf32, #tpu.memory_space<vmem>>, vector<32x120xf32>,
    %c0_46 = arith.constant 0 : index
    %c0_47 = arith.constant 0 : index
    %37 = tpu.strided_load %arg14[%c0_46, %c0_47] {strides = array<i32: 2, 1>} : memref<32x120xf32, #tpu.memory_space<vmem>>, vector<16x120xf32>
    %c1_48 = arith.constant 1 : index
    %c0_49 = arith.constant 0 : index
    %38 = tpu.strided_load %arg14[%c1_48, %c0_49] {strides = array<i32: 2, 1>} : memref<32x120xf32, #tpu.memory_space<vmem>>, vector<16x120xf32>
    %39 = arith.maximumf %37, %38 : vector<16x120xf32>
    %40 = vector.shape_cast %39 : vector<16x120xf32> to vector<2x8x120xf32>
    %c0_50 = arith.constant 0 : index
    %c1_51 = arith.constant 1 : index
    %c0_52 = arith.constant 0 : index
    %41 = vector.load %arg12[%c0_50, %c1_51, %c0_52] : memref<2x10x120xf32, #tpu.memory_space<vmem>>, vector<2x8x120xf32>
    tpu.vector_store %arg12[%c0_50, %c1_51, %c0_52], %40 {strides = array<i32>} : memref<2x10x120xf32, #tpu.memory_space<vmem>>, vector<2x8x120xf32>,
    %c0_53 = arith.constant 0 : index
    %c0_54 = arith.constant 0 : index
    %c0_55 = arith.constant 0 : index
    %42 = vector.load %arg12[%c0_53, %c0_54, %c0_55] : memref<2x10x120xf32, #tpu.memory_space<vmem>>, vector<2x8x120xf32>
    %43 = vector.shape_cast %42 : vector<2x8x120xf32> to vector<16x120xf32>
    %c0_56 = arith.constant 0 : index
    %c0_57 = arith.constant 0 : index
    %c0_58 = arith.constant 0 : index
    %44 = vector.load %arg4[%c0_56, %c0_57, %c0_58] : memref<3x120x64xf32, #tpu.memory_space<vmem>>, vector<1x120x64xf32>
    %45 = vector.shape_cast %44 : vector<1x120x64xf32> to vector<120x64xf32>
    %cst_59 = arith.constant dense<0.000000e+00> : vector<16x64xf32>
    %46 = tpu.matmul %43, %45, %cst_59 {dimension_numbers = #tpu.dot_dimension_numbers<[1], [0], [0], [1], [0, 0, 1, 1], [], []>} : vector<16x120xf32>, vector<120x64xf32>, vector<16x64xf32> -> vector<16x64xf32>
    %c0_60 = arith.constant 0 : index
    %c1_61 = arith.constant 1 : index
    %c0_62 = arith.constant 0 : index
    %47 = vector.load %arg12[%c0_60, %c1_61, %c0_62] : memref<2x10x120xf32, #tpu.memory_space<vmem>>, vector<2x8x120xf32>
    %48 = vector.shape_cast %47 : vector<2x8x120xf32> to vector<16x120xf32>
    %c1_63 = arith.constant 1 : index
    %c0_64 = arith.constant 0 : index
    %c0_65 = arith.constant 0 : index
    %49 = vector.load %arg4[%c1_63, %c0_64, %c0_65] : memref<3x120x64xf32, #tpu.memory_space<vmem>>, vector<1x120x64xf32>
    %50 = vector.shape_cast %49 : vector<1x120x64xf32> to vector<120x64xf32>
    %cst_66 = arith.constant dense<0.000000e+00> : vector<16x64xf32>
    %51 = tpu.matmul %48, %50, %cst_66 {dimension_numbers = #tpu.dot_dimension_numbers<[1], [0], [0], [1], [0, 0, 1, 1], [], []>} : vector<16x120xf32>, vector<120x64xf32>, vector<16x64xf32> -> vector<16x64xf32>
    %52 = arith.addf %46, %51 : vector<16x64xf32>
    %c0_67 = arith.constant 0 : index
    %c2_68 = arith.constant 2 : index
    %c0_69 = arith.constant 0 : index
    %53 = vector.load %arg12[%c0_67, %c2_68, %c0_69] : memref<2x10x120xf32, #tpu.memory_space<vmem>>, vector<2x8x120xf32>
    %54 = vector.shape_cast %53 : vector<2x8x120xf32> to vector<16x120xf32>
    %c2_70 = arith.constant 2 : index
    %c0_71 = arith.constant 0 : index
    %c0_72 = arith.constant 0 : index
    %55 = vector.load %arg4[%c2_70, %c0_71, %c0_72] : memref<3x120x64xf32, #tpu.memory_space<vmem>>, vector<1x120x64xf32>
    %56 = vector.shape_cast %55 : vector<1x120x64xf32> to vector<120x64xf32>
    %cst_73 = arith.constant dense<0.000000e+00> : vector<16x64xf32>
    %57 = tpu.matmul %54, %56, %cst_73 {dimension_numbers = #tpu.dot_dimension_numbers<[1], [0], [0], [1], [0, 0, 1, 1], [], []>} : vector<16x120xf32>, vector<120x64xf32>, vector<16x64xf32> -> vector<16x64xf32>
    %58 = arith.addf %52, %57 : vector<16x64xf32>
    %c0_74 = arith.constant 0 : index
    %c0_75 = arith.constant 0 : index
    %59 = vector.load %arg5[%c0_74, %c0_75] : memref<1x64xf32, #tpu.memory_space<vmem>>, vector<1x64xf32>
    %60 = vector.broadcast %59 : vector<1x64xf32> to vector<16x64xf32>
    %61 = arith.addf %58, %60 : vector<16x64xf32>
    %cst_76 = arith.constant 0.000000e+00 : f32
    %62 = vector.broadcast %cst_76 : f32 to vector<16x64xf32>
    %63 = arith.maximumf %61, %62 : vector<16x64xf32>
    %64 = vector.extract_strided_slice %63 {offsets = [0, 0], sizes = [16, 56], strides = [1, 1]} : vector<16x64xf32> to vector<16x56xf32>
    %65 = vector.extract_strided_slice %63 {offsets = [0, 8], sizes = [16, 56], strides = [1, 1]} : vector<16x64xf32> to vector<16x56xf32>
    %66 = arith.maximumf %64, %65 : vector<16x56xf32>
    %c0_77 = arith.constant 0 : index
    %c0_78 = arith.constant 0 : index
    %67 = vector.load %arg15[%c0_77, %c0_78] : memref<16x56xf32, #tpu.memory_space<vmem>>, vector<16x56xf32>
    tpu.vector_store %arg15[%c0_77, %c0_78], %66 {strides = array<i32>} : memref<16x56xf32, #tpu.memory_space<vmem>>, vector<16x56xf32>,
    %c0_79 = arith.constant 0 : index
    %c0_80 = arith.constant 0 : index
    %68 = tpu.strided_load %arg15[%c0_79, %c0_80] {strides = array<i32: 2, 1>} : memref<16x56xf32, #tpu.memory_space<vmem>>, vector<8x56xf32>
    %c1_81 = arith.constant 1 : index
    %c0_82 = arith.constant 0 : index
    %69 = tpu.strided_load %arg15[%c1_81, %c0_82] {strides = array<i32: 2, 1>} : memref<16x56xf32, #tpu.memory_space<vmem>>, vector<8x56xf32>
    %70 = arith.maximumf %68, %69 : vector<8x56xf32>
    %71 = vector.shape_cast %70 : vector<8x56xf32> to vector<2x4x56xf32>
    %c0_83 = arith.constant 0 : index
    %c1_84 = arith.constant 1 : index
    %c0_85 = arith.constant 0 : index
    %72 = vector.load %arg13[%c0_83, %c1_84, %c0_85] : memref<2x6x56xf32, #tpu.memory_space<vmem>>, vector<2x4x56xf32>
    tpu.vector_store %arg13[%c0_83, %c1_84, %c0_85], %71 {strides = array<i32>} : memref<2x6x56xf32, #tpu.memory_space<vmem>>, vector<2x4x56xf32>,
    %c0_86 = arith.constant 0 : index
    %c0_87 = arith.constant 0 : index
    %c0_88 = arith.constant 0 : index
    %73 = vector.load %arg13[%c0_86, %c0_87, %c0_88] : memref<2x6x56xf32, #tpu.memory_space<vmem>>, vector<2x4x56xf32>
    %74 = vector.shape_cast %73 : vector<2x4x56xf32> to vector<8x56xf32>
    %c0_89 = arith.constant 0 : index
    %c0_90 = arith.constant 0 : index
    %c0_91 = arith.constant 0 : index
    %75 = vector.load %arg6[%c0_89, %c0_90, %c0_91] : memref<3x56x32xf32, #tpu.memory_space<vmem>>, vector<1x56x32xf32>
    %76 = vector.shape_cast %75 : vector<1x56x32xf32> to vector<56x32xf32>
    %cst_92 = arith.constant dense<0.000000e+00> : vector<8x32xf32>
    %77 = tpu.matmul %74, %76, %cst_92 {dimension_numbers = #tpu.dot_dimension_numbers<[1], [0], [0], [1], [0, 0, 1, 1], [], []>} : vector<8x56xf32>, vector<56x32xf32>, vector<8x32xf32> -> vector<8x32xf32>
    %c0_93 = arith.constant 0 : index
    %c1_94 = arith.constant 1 : index
    %c0_95 = arith.constant 0 : index
    %78 = vector.load %arg13[%c0_93, %c1_94, %c0_95] : memref<2x6x56xf32, #tpu.memory_space<vmem>>, vector<2x4x56xf32>
    %79 = vector.shape_cast %78 : vector<2x4x56xf32> to vector<8x56xf32>
    %c1_96 = arith.constant 1 : index
    %c0_97 = arith.constant 0 : index
    %c0_98 = arith.constant 0 : index
    %80 = vector.load %arg6[%c1_96, %c0_97, %c0_98] : memref<3x56x32xf32, #tpu.memory_space<vmem>>, vector<1x56x32xf32>
    %81 = vector.shape_cast %80 : vector<1x56x32xf32> to vector<56x32xf32>
    %cst_99 = arith.constant dense<0.000000e+00> : vector<8x32xf32>
    %82 = tpu.matmul %79, %81, %cst_99 {dimension_numbers = #tpu.dot_dimension_numbers<[1], [0], [0], [1], [0, 0, 1, 1], [], []>} : vector<8x56xf32>, vector<56x32xf32>, vector<8x32xf32> -> vector<8x32xf32>
    %83 = arith.addf %77, %82 : vector<8x32xf32>
    %c0_100 = arith.constant 0 : index
    %c2_101 = arith.constant 2 : index
    %c0_102 = arith.constant 0 : index
    %84 = vector.load %arg13[%c0_100, %c2_101, %c0_102] : memref<2x6x56xf32, #tpu.memory_space<vmem>>, vector<2x4x56xf32>
    %85 = vector.shape_cast %84 : vector<2x4x56xf32> to vector<8x56xf32>
    %c2_103 = arith.constant 2 : index
    %c0_104 = arith.constant 0 : index
    %c0_105 = arith.constant 0 : index
    %86 = vector.load %arg6[%c2_103, %c0_104, %c0_105] : memref<3x56x32xf32, #tpu.memory_space<vmem>>, vector<1x56x32xf32>
    %87 = vector.shape_cast %86 : vector<1x56x32xf32> to vector<56x32xf32>
    %cst_106 = arith.constant dense<0.000000e+00> : vector<8x32xf32>
    %88 = tpu.matmul %85, %87, %cst_106 {dimension_numbers = #tpu.dot_dimension_numbers<[1], [0], [0], [1], [0, 0, 1, 1], [], []>} : vector<8x56xf32>, vector<56x32xf32>, vector<8x32xf32> -> vector<8x32xf32>
    %89 = arith.addf %83, %88 : vector<8x32xf32>
    %c0_107 = arith.constant 0 : index
    %c0_108 = arith.constant 0 : index
    %90 = vector.load %arg7[%c0_107, %c0_108] : memref<1x32xf32, #tpu.memory_space<vmem>>, vector<1x32xf32>
    %91 = vector.broadcast %90 : vector<1x32xf32> to vector<8x32xf32>
    %92 = arith.addf %89, %91 : vector<8x32xf32>
    %cst_109 = arith.constant 0.000000e+00 : f32
    %93 = vector.broadcast %cst_109 : f32 to vector<8x32xf32>
    %94 = arith.maximumf %92, %93 : vector<8x32xf32>
    %95 = vector.extract_strided_slice %94 {offsets = [0, 0], sizes = [8, 24], strides = [1, 1]} : vector<8x32xf32> to vector<8x24xf32>
    %96 = vector.extract_strided_slice %94 {offsets = [0, 8], sizes = [8, 24], strides = [1, 1]} : vector<8x32xf32> to vector<8x24xf32>
    %97 = arith.maximumf %95, %96 : vector<8x24xf32>
    %c0_110 = arith.constant 0 : index
    %c0_111 = arith.constant 0 : index
    %98 = vector.load %arg16[%c0_110, %c0_111] : memref<8x24xf32, #tpu.memory_space<vmem>>, vector<8x24xf32>
    tpu.vector_store %arg16[%c0_110, %c0_111], %97 {strides = array<i32>} : memref<8x24xf32, #tpu.memory_space<vmem>>, vector<8x24xf32>,
    %c0_112 = arith.constant 0 : index
    %c0_113 = arith.constant 0 : index
    %99 = tpu.strided_load %arg16[%c0_112, %c0_113] {strides = array<i32: 4, 1>} : memref<8x24xf32, #tpu.memory_space<vmem>>, vector<2x24xf32>
    %c1_114 = arith.constant 1 : index
    %c0_115 = arith.constant 0 : index
    %100 = tpu.strided_load %arg16[%c1_114, %c0_115] {strides = array<i32: 4, 1>} : memref<8x24xf32, #tpu.memory_space<vmem>>, vector<2x24xf32>
    %101 = arith.maximumf %99, %100 : vector<2x24xf32>
    %c0_116 = arith.constant 0 : index
    %c0_117 = arith.constant 0 : index
    %c0_118 = arith.constant 0 : index
    %102 = vector.load %arg8[%c0_116, %c0_117, %c0_118] : memref<2x24x128xf32, #tpu.memory_space<vmem>>, vector<1x24x128xf32>
    %103 = vector.shape_cast %102 : vector<1x24x128xf32> to vector<24x128xf32>
    %cst_119 = arith.constant dense<0.000000e+00> : vector<2x128xf32>
    %104 = tpu.matmul %101, %103, %cst_119 {dimension_numbers = #tpu.dot_dimension_numbers<[1], [0], [0], [1], [0, 0, 1, 1], [], []>} : vector<2x24xf32>, vector<24x128xf32>, vector<2x128xf32> -> vector<2x128xf32>
    %c2_120 = arith.constant 2 : index
    %c0_121 = arith.constant 0 : index
    %105 = tpu.strided_load %arg16[%c2_120, %c0_121] {strides = array<i32: 4, 1>} : memref<8x24xf32, #tpu.memory_space<vmem>>, vector<2x24xf32>
    %c3 = arith.constant 3 : index
    %c0_122 = arith.constant 0 : index
    %106 = tpu.strided_load %arg16[%c3, %c0_122] {strides = array<i32: 4, 1>} : memref<8x24xf32, #tpu.memory_space<vmem>>, vector<2x24xf32>
    %107 = arith.maximumf %105, %106 : vector<2x24xf32>
    %c1_123 = arith.constant 1 : index
    %c0_124 = arith.constant 0 : index
    %c0_125 = arith.constant 0 : index
    %108 = vector.load %arg8[%c1_123, %c0_124, %c0_125] : memref<2x24x128xf32, #tpu.memory_space<vmem>>, vector<1x24x128xf32>
    %109 = vector.shape_cast %108 : vector<1x24x128xf32> to vector<24x128xf32>
    %cst_126 = arith.constant dense<0.000000e+00> : vector<2x128xf32>
    %110 = tpu.matmul %107, %109, %cst_126 {dimension_numbers = #tpu.dot_dimension_numbers<[1], [0], [0], [1], [0, 0, 1, 1], [], []>} : vector<2x24xf32>, vector<24x128xf32>, vector<2x128xf32> -> vector<2x128xf32>
    %111 = arith.addf %104, %110 : vector<2x128xf32>
    %c0_127 = arith.constant 0 : index
    %c0_128 = arith.constant 0 : index
    %112 = vector.load %arg9[%c0_127, %c0_128] : memref<1x128xf32, #tpu.memory_space<vmem>>, vector<1x128xf32>
    %113 = vector.broadcast %112 : vector<1x128xf32> to vector<2x128xf32>
    %114 = arith.addf %111, %113 : vector<2x128xf32>
    %cst_129 = arith.constant dense<0xFF800000> : vector<2xf32>
    %115 = vector.multi_reduction <maximumf>, %114, %cst_129 [1] : vector<2x128xf32> to vector<2xf32>
    %116 = vector.shape_cast %115 : vector<2xf32> to vector<2x1xf32>
    %117 = vector.broadcast %116 : vector<2x1xf32> to vector<2x128xf32>
    %118 = arith.subf %114, %117 : vector<2x128xf32>
    %119 = math.exp %118 : vector<2x128xf32>
    %cst_130 = arith.constant dense<0.000000e+00> : vector<2xf32>
    %120 = vector.multi_reduction <add>, %119, %cst_130 [1] : vector<2x128xf32> to vector<2xf32>
    %121 = vector.shape_cast %120 : vector<2xf32> to vector<2x1xf32>
    %122 = math.log %121 : vector<2x1xf32>
    %123 = vector.broadcast %122 : vector<2x1xf32> to vector<2x128xf32>
    %124 = arith.subf %118, %123 : vector<2x128xf32>
    %c0_131 = arith.constant 0 : index
    %c0_132 = arith.constant 0 : index
    %125 = vector.load %arg10[%c0_131, %c0_132] : memref<2x128xf32, #tpu.memory_space<vmem>>, vector<2x128xf32>
    tpu.vector_store %arg10[%c0_131, %c0_132], %124 {strides = array<i32>} : memref<2x128xf32, #tpu.memory_space<vmem>>, vector<2x128xf32>,
    return
  }
  func.func @transform_0(%arg0: i32) -> (i32, i32, i32) {
    %c0_i32 = arith.constant 0 : i32
    %c0_i32_0 = arith.constant 0 : i32
    %c0_i32_1 = arith.constant 0 : i32
    return %arg0, %c0_i32, %c0_i32_0 : i32, i32, i32
  }
  func.func @transform_1(%arg0: i32) -> (i32, i32, i32) {
    %c0_i32 = arith.constant 0 : i32
    %c0_i32_0 = arith.constant 0 : i32
    %c0_i32_1 = arith.constant 0 : i32
    %c0_i32_2 = arith.constant 0 : i32
    return %c0_i32, %c0_i32_0, %c0_i32_1 : i32, i32, i32
  }
  func.func @transform_2(%arg0: i32) -> (i32, i32) {
    %c0_i32 = arith.constant 0 : i32
    %c0_i32_0 = arith.constant 0 : i32
    %c0_i32_1 = arith.constant 0 : i32
    return %c0_i32, %c0_i32_0 : i32, i32
  }
  func.func @transform_3(%arg0: i32) -> (i32, i32, i32) {
    %c0_i32 = arith.constant 0 : i32
    %c0_i32_0 = arith.constant 0 : i32
    %c0_i32_1 = arith.constant 0 : i32
    %c0_i32_2 = arith.constant 0 : i32
    return %c0_i32, %c0_i32_0, %c0_i32_1 : i32, i32, i32
  }
  func.func @transform_4(%arg0: i32) -> (i32, i32) {
    %c0_i32 = arith.constant 0 : i32
    %c0_i32_0 = arith.constant 0 : i32
    %c0_i32_1 = arith.constant 0 : i32
    return %c0_i32, %c0_i32_0 : i32, i32
  }
  func.func @transform_5(%arg0: i32) -> (i32, i32, i32) {
    %c0_i32 = arith.constant 0 : i32
    %c0_i32_0 = arith.constant 0 : i32
    %c0_i32_1 = arith.constant 0 : i32
    %c0_i32_2 = arith.constant 0 : i32
    return %c0_i32, %c0_i32_0, %c0_i32_1 : i32, i32, i32
  }
  func.func @transform_6(%arg0: i32) -> (i32, i32) {
    %c0_i32 = arith.constant 0 : i32
    %c0_i32_0 = arith.constant 0 : i32
    %c0_i32_1 = arith.constant 0 : i32
    return %c0_i32, %c0_i32_0 : i32, i32
  }
  func.func @transform_7(%arg0: i32) -> (i32, i32, i32) {
    %c0_i32 = arith.constant 0 : i32
    %c0_i32_0 = arith.constant 0 : i32
    %c0_i32_1 = arith.constant 0 : i32
    %c0_i32_2 = arith.constant 0 : i32
    return %c0_i32, %c0_i32_0, %c0_i32_1 : i32, i32, i32
  }
  func.func @transform_8(%arg0: i32) -> (i32, i32) {
    %c0_i32 = arith.constant 0 : i32
    %c0_i32_0 = arith.constant 0 : i32
    %c0_i32_1 = arith.constant 0 : i32
    return %c0_i32, %c0_i32_0 : i32, i32
  }
  func.func @transform_9(%arg0: i32) -> (i32, i32) {
    %c0_i32 = arith.constant 0 : i32
    %c0_i32_0 = arith.constant 0 : i32
    return %arg0, %c0_i32 : i32, i32
  }
}

</mosaic_0001>

<llo_original>
// kernel: forward.1
$region0: #{forward.1}
  #allocation0 [shape = 'u32[]', space=smem, size = 0x4, offset = 0x4, fixed_abs, tag = 'smem constant byte address 0x4 - core index']
  #allocation1 [shape = 'u32[144,128]{1,0:T(1,128)}', space=vmem, size = 0x12000, scoped, tag = 'internal scratch']
  #allocation2 [shape = 'f32[2,18,48]{2,1,0:T(8,128)}', space=vmem, size = 0x6000, scoped, tag = 'scratch operand']
  #allocation3 [shape = 'f32[2,10,120]{2,1,0:T(8,128)}', space=vmem, size = 0x4000, scoped, tag = 'scratch operand']
  #allocation4 [shape = 'f32[2,6,56]{2,1,0:T(8,128)}', space=vmem, size = 0x2000, scoped, tag = 'scratch operand']
  #allocation5 [shape = 'f32[32,120]{1,0:T(8,128)}', space=vmem, size = 0x4000, scoped, tag = 'scratch operand']
  #allocation6 [shape = 'f32[16,56]{1,0:T(8,128)}', space=vmem, size = 0x2000, scoped, tag = 'scratch operand']
  #allocation7 [shape = 'f32[8,24]{1,0:T(8,128)}', space=vmem, size = 0x1000, scoped, tag = 'scratch operand']
  %s0 = inlined_call_operand.vmem [shape: f32[2,16,48], index: 0, kind: input, shape index: {}]
  %s1 = inlined_call_operand.vmem [shape: f32[3,48,128], index: 1, kind: input, shape index: {}]
  %s2 = inlined_call_operand.vmem [shape: f32[1,128], index: 2, kind: input, shape index: {}]
  %s3 = inlined_call_operand.vmem [shape: f32[3,120,64], index: 3, kind: input, shape index: {}]
  %s4 = inlined_call_operand.vmem [shape: f32[1,64], index: 4, kind: input, shape index: {}]
  %s5 = inlined_call_operand.vmem [shape: f32[3,56,32], index: 5, kind: input, shape index: {}]
  %s6 = inlined_call_operand.vmem [shape: f32[1,32], index: 6, kind: input, shape index: {}]
  %s7 = inlined_call_operand.vmem [shape: f32[2,24,128], index: 7, kind: input, shape index: {}]
  %s8 = inlined_call_operand.vmem [shape: f32[1,128], index: 8, kind: input, shape index: {}]
  %s9 = inlined_call_operand.hbm [shape: f32[2,128], index: 9, kind: output, shape index: {}]
  %s10 = sld [smem:[#allocation0]]
  $region46: #{forward.1} parent=0
    _
  %s12 = ssub.s32 1, %s10
  %s13 = scalar_select 0, %s12, %s10
  $region1: #{forward.1} parent=0
    #allocation8 [shape = 'u8[1024]{0}', space=vmem, size = 0x400, scoped, tag = 'output window, operand 0, single buffered']
    #allocation9 [shape = 's32[1]{0}', space=sflag, size = 0x4, scoped, tag = 'scoped memory for forward.1']
    %14 = vsyncpa [#allocation9], 0
    // Predicated region
    $region2: #{forward.1} parent=1 // pred_check
      _
    $region3: #{forward.1} parent=1 // pred_check_branch
      %16 = sbr.rel (0) target = $region5
    $region4: #{forward.1} parent=1 // pred_region
      _
    $region5: #{forward.1} parent=1 // pred_fallthru
      _
    // Predicated region
    $region6: #{forward.1} parent=1 // pred_check
      _
    $region7: #{forward.1} parent=1 // pred_check_branch
      %18 = sbr.rel (0) target = $region9
    $region8: #{forward.1} parent=1 // pred_region
      _
    $region9: #{forward.1} parent=1 // pred_fallthru
      _
    // Predicated region
    $region10: #{forward.1} parent=1 // pred_check
      _
    $region11: #{forward.1} parent=1 // pred_check_branch
      %20 = sbr.rel (0) target = $region13
    $region12: #{forward.1} parent=1 // pred_region
      _
    $region13: #{forward.1} parent=1 // pred_fallthru
      _
    // Predicated region
    $region14: #{forward.1} parent=1 // pred_check
      _
    $region15: #{forward.1} parent=1 // pred_check_branch
      %22 = sbr.rel (0) target = $region17
    $region16: #{forward.1} parent=1 // pred_region
      _
    $region17: #{forward.1} parent=1 // pred_fallthru
      _
    // Predicated region
    $region18: #{forward.1} parent=1 // pred_check
      _
    $region19: #{forward.1} parent=1 // pred_check_branch
      %24 = sbr.rel (0) target = $region21
    $region20: #{forward.1} parent=1 // pred_region
      _
    $region21: #{forward.1} parent=1 // pred_fallthru
      _
    // Predicated region
    $region22: #{forward.1} parent=1 // pred_check
      _
    $region23: #{forward.1} parent=1 // pred_check_branch
      %26 = sbr.rel (0) target = $region25
    $region24: #{forward.1} parent=1 // pred_region
      _
    $region25: #{forward.1} parent=1 // pred_fallthru
      _
    // Predicated region
    $region26: #{forward.1} parent=1 // pred_check
      _
    $region27: #{forward.1} parent=1 // pred_check_branch
      %28 = sbr.rel (0) target = $region29
    $region28: #{forward.1} parent=1 // pred_region
      _
    $region29: #{forward.1} parent=1 // pred_fallthru
      _
    // Predicated region
    $region30: #{forward.1} parent=1 // pred_check
      _
    $region31: #{forward.1} parent=1 // pred_check_branch
      %30 = sbr.rel (0) target = $region33
    $region32: #{forward.1} parent=1 // pred_region
      _
    $region33: #{forward.1} parent=1 // pred_fallthru
      _
    // Predicated region
    $region34: #{forward.1} parent=1 // pred_check
      _
    $region35: #{forward.1} parent=1 // pred_check_branch
      %32 = sbr.rel (0) target = $region37
    $region36: #{forward.1} parent=1 // pred_region
      _
    $region37: #{forward.1} parent=1 // pred_fallthru
      _
    %vm33 = vcmask 385024
    %34 = vst.msk [vmem:[#allocation2] sm:$0x1] %vm33, 0.0
    %35 = vst.msk [vmem:[#allocation2 + $0x18] sm:$0x1] %vm33, 0.0
    %36 = vst.msk [vmem:[#allocation2 + $0x11] sm:$0x1] %vm33, 0.0
    %37 = vst.msk [vmem:[#allocation2 + $0x29] sm:$0x1] %vm33, 0.0
    %vm38 = vcmask 974848
    %39 = vst.msk [vmem:[#allocation3] sm:$0x1] %vm38, 0.0
    %40 = vst.msk [vmem:[#allocation3 + $0x10] sm:$0x1] %vm38, 0.0
    %41 = vst.msk [vmem:[#allocation3 + $0x9] sm:$0x1] %vm38, 0.0
    %42 = vst.msk [vmem:[#allocation3 + $0x19] sm:$0x1] %vm38, 0.0
    %vm43 = vcmask 450560
    %44 = vst.msk [vmem:[#allocation4] sm:$0x1] %vm43, 0.0
    %45 = vst.msk [vmem:[#allocation4 + $0x8] sm:$0x1] %vm43, 0.0
    %46 = vst.msk [vmem:[#allocation4 + $0x5] sm:$0x1] %vm43, 0.0
    %47 = vst.msk [vmem:[#allocation4 + $0xd] sm:$0x1] %vm43, 0.0
    %v48 = vld [vmem:[%s0] sm:$0xff]
    %v49 = vld [vmem:[%s0 + $0x8] sm:$0xff]
    %v50 = vld [vmem:[%s0 + $0x10] sm:$0xff]
    %v51 = vld [vmem:[%s0 + $0x18] sm:$0xff]
    %vm52 = vcmask 392192
    %53 = vst.msk [vmem:[#allocation2 + $0x1] sm:$0xff] %vm52, %v48
    %54 = vst.msk [vmem:[#allocation2 + $0x9] sm:$0xff] %vm52, %v49
    %55 = vst.msk [vmem:[#allocation2 + $0x19] sm:$0xff] %vm52, %v50
    %56 = vst.msk [vmem:[#allocation2 + $0x21] sm:$0xff] %vm52, %v51
    %v57 = vld [vmem:[#allocation2] sm:$0xff]
    %v58 = vld [vmem:[#allocation2 + $0x8] sm:$0xff]
    %v59 = vld [vmem:[#allocation2 + $0x18] sm:$0xff]
    %v60 = vld [vmem:[#allocation2 + $0x20] sm:$0xff]
    %v61 = vld [vmem:[%s1] sm:$0xff]
    %v62 = vld [vmem:[%s1 + $0x8] sm:$0xff]
    %v63 = vld [vmem:[%s1 + $0x10] sm:$0xff]
    %v64 = vld [vmem:[%s1 + $0x18] sm:$0xff]
    %v65 = vld [vmem:[%s1 + $0x20] sm:$0xff]
    %v66 = vld [vmem:[%s1 + $0x28] sm:$0xff]
    %v67 = vld [vmem:[#allocation2 + $0x1] sm:$0xff]
    %v68 = vld [vmem:[#allocation2 + $0x9] sm:$0xff]
    %v69 = vld [vmem:[#allocation2 + $0x19] sm:$0xff]
    %v70 = vld [vmem:[#allocation2 + $0x21] sm:$0xff]
    %s71 = scalar_lea.vmem %s1, 48
    %v72 = vld [vmem:[%s71] sm:$0xff]
    %v73 = vld [vmem:[%s71 + $0x8] sm:$0xff]
    %v74 = vld [vmem:[%s71 + $0x10] sm:$0xff]
    %v75 = vld [vmem:[%s71 + $0x18] sm:$0xff]
    %v76 = vld [vmem:[%s71 + $0x20] sm:$0xff]
    %v77 = vld [vmem:[%s71 + $0x28] sm:$0xff]
    %v79 = vsel %vm52, %v67, 0
    %v82 = vsel %vm52, %v68, 0
    %v85 = vsel %vm52, %v69, 0
    %v88 = vsel %vm52, %v70, 0
    %90 = vmatprep.subr.mxu0 0.0
    %91 = vmatpush1.msra.mxu0 %v72
    %92 = vmatprep.subr.mxu0 0.0
    %93 = vmatpush1.msra.mxu0 %v73
    %94 = vmatprep.subr.mxu0 0.0
    %95 = vmatpush1.msra.mxu0 %v74
    %96 = vmatprep.subr.mxu0 0.0
    %97 = vmatpush1.msra.mxu0 %v75
    %98 = vmatprep.subr.mxu0 0.0
    %99 = vmatpush1.msra.mxu0 %v76
    %100 = vmatprep.subr.mxu0 0.0
    %101 = vmatpush1.msra.mxu0 %v77
    %102 = vmatprep.subr.mxu0 0.0
    %103 = vmatpush1.msra.mxu0 0.0
    %104 = vmatprep.subr.mxu0 0.0
    %105 = vmatpush1.msra.mxu0 0.0
    %106 = vmatprep.subr.mxu0 0.0
    %107 = vmatpush1.msra.mxu0 0.0
    %108 = vmatprep.subr.mxu0 0.0
    %109 = vmatpush1.msra.mxu0 0.0
    %110 = vmatprep.subr.mxu0 0.0
    %111 = vmatpush1.msra.mxu0 0.0
    %112 = vmatprep.subr.mxu0 0.0
    %113 = vmatpush1.msra.mxu0 0.0
    %114 = vmatprep.subr.mxu0 0.0
    %115 = vmatpush1.msra.mxu0 0.0
    %116 = vmatprep.subr.mxu0 0.0
    %117 = vmatpush1.msra.mxu0 0.0
    %118 = vmatprep.subr.mxu0 0.0
    %119 = vmatpush1.msra.mxu0 0.0
    %120 = vmatprep.subr.mxu0 0.0
    %121 = vmatpush1.msra.mxu0 0.0
    %122 = vmatprep.subr.mxu0 0.0
    %123 = vmatpush1.msra.mxu0 0.0
    %124 = vmatprep.subr.mxu0 0.0
    %125 = vmatpush1.msra.mxu0 0.0
    %126 = vmatprep.subr.mxu0 0.0
    %127 = vmatpush1.msra.mxu0 0.0
    %128 = vmatprep.subr.mxu0 0.0
    %129 = vmatpush1.msra.mxu0 0.0
    %130 = vmatprep.subr.mxu0 0.0
    %131 = vmatpush1.msra.mxu0 0.0
    %132 = vmatprep.subr.mxu0 0.0
    %133 = vmatpush1.msra.mxu0 0.0
    %134 = vmatprep.subr.mxu0 0.0
    %135 = vmatpush1.msra.mxu0 0.0
    %136 = vmatprep.subr.mxu0 0.0
    %137 = vmatpush1.msra.mxu0 0.0
    %138 = vmatprep.subr.mxu0 0.0
    %139 = vmatpush1.msra.mxu0 0.0
    %140 = vmatprep.subr.mxu0 0.0
    %141 = vmatpush1.msra.mxu0 0.0
    %142 = vmatprep.subr.mxu0 0.0
    %143 = vmatpush1.msra.mxu0 0.0
    %144 = vmatprep.subr.mxu0 0.0
    %145 = vmatpush1.msra.mxu0 0.0
    %146 = vmatprep.subr.mxu0 0.0
    %147 = vmatpush1.msra.mxu0 0.0
    %148 = vmatprep.subr.mxu0 0.0
    %149 = vmatpush1.msra.mxu0 0.0
    %150 = vmatprep.subr.mxu0 0.0
    %151 = vmatpush1.msra.mxu0 0.0
    %152 = vmatprep.subr.mxu0 0.0
    %153 = vmatpush1.msra.mxu0 0.0
    %154 = vmatprep.mubr.f32.mxu0 0.0
    %155 = vmatmul.mubr.f32.gmra.mrb[0].mxu0 %v79
    %v156 = vpop.f32.mrb[0].mxu0
    %v157 = vadd.f32 0.0, %v156
    %v158 = vpop.f32.mrb[0].mxu0
    %159 = vmatprep.mubr.f32.mxu0 0.0
    %160 = vmatmul.mubr.f32.gmra.mrb[0].mxu0 %v82
    %v161 = vpop.f32.mrb[0].mxu0
    %v162 = vadd.f32 0.0, %v161
    %v163 = vpop.f32.mrb[0].mxu0
    %164 = vmatprep.mubr.f32.mxu0 0.0
    %165 = vmatmul.mubr.f32.gmra.mrb[0].mxu0 %v85
    %v166 = vpop.f32.mrb[0].mxu0
    %v167 = vadd.f32 0.0, %v166
    %v168 = vpop.f32.mrb[0].mxu0
    %169 = vmatprep.mubr.f32.mxu0 0.0
    %170 = vmatmul.mubr.f32.gmra.mrb[0].mxu0 %v88
    %v171 = vpop.f32.mrb[0].mxu0
    %v172 = vadd.f32 0.0, %v171
    %v173 = vpop.f32.mrb[0].mxu0
    %174 = vdwg.mxu0
    %v176 = vsel %vm52, %v57, 0
    %v179 = vsel %vm52, %v58, 0
    %v182 = vsel %vm52, %v59, 0
    %v185 = vsel %vm52, %v60, 0
    %187 = vmatprep.subr.mxu0 0.0
    %188 = vmatpush1.msra.mxu0 %v61
    %189 = vmatprep.subr.mxu0 0.0
    %190 = vmatpush1.msra.mxu0 %v62
    %191 = vmatprep.subr.mxu0 0.0
    %192 = vmatpush1.msra.mxu0 %v63
    %193 = vmatprep.subr.mxu0 0.0
    %194 = vmatpush1.msra.mxu0 %v64
    %195 = vmatprep.subr.mxu0 0.0
    %196 = vmatpush1.msra.mxu0 %v65
    %197 = vmatprep.subr.mxu0 0.0
    %198 = vmatpush1.msra.mxu0 %v66
    %199 = vmatprep.subr.mxu0 0.0
    %200 = vmatpush1.msra.mxu0 0.0
    %201 = vmatprep.subr.mxu0 0.0
    %202 = vmatpush1.msra.mxu0 0.0
    %203 = vmatprep.subr.mxu0 0.0
    %204 = vmatpush1.msra.mxu0 0.0
    %205 = vmatprep.subr.mxu0 0.0
    %206 = vmatpush1.msra.mxu0 0.0
    %207 = vmatprep.subr.mxu0 0.0
    %208 = vmatpush1.msra.mxu0 0.0
    %209 = vmatprep.subr.mxu0 0.0
    %210 = vmatpush1.msra.mxu0 0.0
    %211 = vmatprep.subr.mxu0 0.0
    %212 = vmatpush1.msra.mxu0 0.0
    %213 = vmatprep.subr.mxu0 0.0
    %214 = vmatpush1.msra.mxu0 0.0
    %215 = vmatprep.subr.mxu0 0.0
    %216 = vmatpush1.msra.mxu0 0.0
    %217 = vmatprep.subr.mxu0 0.0
    %218 = vmatpush1.msra.mxu0 0.0
    %219 = vmatprep.subr.mxu0 0.0
    %220 = vmatpush1.msra.mxu0 0.0
    %221 = vmatprep.subr.mxu0 0.0
    %222 = vmatpush1.msra.mxu0 0.0
    %223 = vmatprep.subr.mxu0 0.0
    %224 = vmatpush1.msra.mxu0 0.0
    %225 = vmatprep.subr.mxu0 0.0
    %226 = vmatpush1.msra.mxu0 0.0
    %227 = vmatprep.subr.mxu0 0.0
    %228 = vmatpush1.msra.mxu0 0.0
    %229 = vmatprep.subr.mxu0 0.0
    %230 = vmatpush1.msra.mxu0 0.0
    %231 = vmatprep.subr.mxu0 0.0
    %232 = vmatpush1.msra.mxu0 0.0
    %233 = vmatprep.subr.mxu0 0.0
    %234 = vmatpush1.msra.mxu0 0.0
    %235 = vmatprep.subr.mxu0 0.0
    %236 = vmatpush1.msra.mxu0 0.0
    %237 = vmatprep.subr.mxu0 0.0
    %238 = vmatpush1.msra.mxu0 0.0
    %239 = vmatprep.subr.mxu0 0.0
    %240 = vmatpush1.msra.mxu0 0.0
    %241 = vmatprep.subr.mxu0 0.0
    %242 = vmatpush1.msra.mxu0 0.0
    %243 = vmatprep.subr.mxu0 0.0
    %244 = vmatpush1.msra.mxu0 0.0
    %245 = vmatprep.subr.mxu0 0.0
    %246 = vmatpush1.msra.mxu0 0.0
    %247 = vmatprep.subr.mxu0 0.0
    %248 = vmatpush1.msra.mxu0 0.0
    %249 = vmatprep.subr.mxu0 0.0
    %250 = vmatpush1.msra.mxu0 0.0
    %251 = vmatprep.mubr.f32.mxu0 0.0
    %252 = vmatmul.mubr.f32.gmra.mrb[0].mxu0 %v176
    %v253 = vpop.f32.mrb[0].mxu0
    %v254 = vadd.f32 %v157, %v253
    %v255 = vpop.f32.mrb[0].mxu0
    %256 = vmatprep.mubr.f32.mxu0 0.0
    %257 = vmatmul.mubr.f32.gmra.mrb[0].mxu0 %v179
    %v258 = vpop.f32.mrb[0].mxu0
    %v259 = vadd.f32 %v162, %v258
    %v260 = vpop.f32.mrb[0].mxu0
    %261 = vmatprep.mubr.f32.mxu0 0.0
    %262 = vmatmul.mubr.f32.gmra.mrb[0].mxu0 %v182
    %v263 = vpop.f32.mrb[0].mxu0
    %v264 = vadd.f32 %v167, %v263
    %v265 = vpop.f32.mrb[0].mxu0
    %266 = vmatprep.mubr.f32.mxu0 0.0
    %267 = vmatmul.mubr.f32.gmra.mrb[0].mxu0 %v185
    %v268 = vpop.f32.mrb[0].mxu0
    %v269 = vadd.f32 %v172, %v268
    %v270 = vpop.f32.mrb[0].mxu0
    %271 = vdwg.mxu0
    %v272 = vld [vmem:[#allocation2 + $0x2] sm:$0xff]
    %v273 = vld [vmem:[#allocation2 + $0xa] sm:$0xff]
    %v274 = vld [vmem:[#allocation2 + $0x1a] sm:$0xff]
    %v275 = vld [vmem:[#allocation2 + $0x22] sm:$0xff]
    %s276 = scalar_lea.vmem %s1, 96
    %v277 = vld [vmem:[%s276] sm:$0xff]
    %v278 = vld [vmem:[%s276 + $0x8] sm:$0xff]
    %v279 = vld [vmem:[%s276 + $0x10] sm:$0xff]
    %v280 = vld [vmem:[%s276 + $0x18] sm:$0xff]
    %v281 = vld [vmem:[%s276 + $0x20] sm:$0xff]
    %v282 = vld [vmem:[%s276 + $0x28] sm:$0xff]
    %v284 = vsel %vm52, %v272, 0
    %v287 = vsel %vm52, %v273, 0
    %v290 = vsel %vm52, %v274, 0
    %v293 = vsel %vm52, %v275, 0
    %295 = vmatprep.subr.mxu0 0.0
    %296 = vmatpush1.msra.mxu0 %v277
    %297 = vmatprep.subr.mxu0 0.0
    %298 = vmatpush1.msra.mxu0 %v278
    %299 = vmatprep.subr.mxu0 0.0
    %300 = vmatpush1.msra.mxu0 %v279
    %301 = vmatprep.subr.mxu0 0.0
    %302 = vmatpush1.msra.mxu0 %v280
    %303 = vmatprep.subr.mxu0 0.0
    %304 = vmatpush1.msra.mxu0 %v281
    %305 = vmatprep.subr.mxu0 0.0
    %306 = vmatpush1.msra.mxu0 %v282
    %307 = vmatprep.subr.mxu0 0.0
    %308 = vmatpush1.msra.mxu0 0.0
    %309 = vmatprep.subr.mxu0 0.0
    %310 = vmatpush1.msra.mxu0 0.0
    %311 = vmatprep.subr.mxu0 0.0
    %312 = vmatpush1.msra.mxu0 0.0
    %313 = vmatprep.subr.mxu0 0.0
    %314 = vmatpush1.msra.mxu0 0.0
    %315 = vmatprep.subr.mxu0 0.0
    %316 = vmatpush1.msra.mxu0 0.0
    %317 = vmatprep.subr.mxu0 0.0
    %318 = vmatpush1.msra.mxu0 0.0
    %319 = vmatprep.subr.mxu0 0.0
    %320 = vmatpush1.msra.mxu0 0.0
    %321 = vmatprep.subr.mxu0 0.0
    %322 = vmatpush1.msra.mxu0 0.0
    %323 = vmatprep.subr.mxu0 0.0
    %324 = vmatpush1.msra.mxu0 0.0
    %325 = vmatprep.subr.mxu0 0.0
    %326 = vmatpush1.msra.mxu0 0.0
    %327 = vmatprep.subr.mxu0 0.0
    %328 = vmatpush1.msra.mxu0 0.0
    %329 = vmatprep.subr.mxu0 0.0
    %330 = vmatpush1.msra.mxu0 0.0
    %331 = vmatprep.subr.mxu0 0.0
    %332 = vmatpush1.msra.mxu0 0.0
    %333 = vmatprep.subr.mxu0 0.0
    %334 = vmatpush1.msra.mxu0 0.0
    %335 = vmatprep.subr.mxu0 0.0
    %336 = vmatpush1.msra.mxu0 0.0
    %337 = vmatprep.subr.mxu0 0.0
    %338 = vmatpush1.msra.mxu0 0.0
    %339 = vmatprep.subr.mxu0 0.0
    %340 = vmatpush1.msra.mxu0 0.0
    %341 = vmatprep.subr.mxu0 0.0
    %342 = vmatpush1.msra.mxu0 0.0
    %343 = vmatprep.subr.mxu0 0.0
    %344 = vmatpush1.msra.mxu0 0.0
    %345 = vmatprep.subr.mxu0 0.0
    %346 = vmatpush1.msra.mxu0 0.0
    %347 = vmatprep.subr.mxu0 0.0
    %348 = vmatpush1.msra.mxu0 0.0
    %349 = vmatprep.subr.mxu0 0.0
    %350 = vmatpush1.msra.mxu0 0.0
    %351 = vmatprep.subr.mxu0 0.0
    %352 = vmatpush1.msra.mxu0 0.0
    %353 = vmatprep.subr.mxu0 0.0
    %354 = vmatpush1.msra.mxu0 0.0
    %355 = vmatprep.subr.mxu0 0.0
    %356 = vmatpush1.msra.mxu0 0.0
    %357 = vmatprep.subr.mxu0 0.0
    %358 = vmatpush1.msra.mxu0 0.0
    %359 = vmatprep.mubr.f32.mxu0 0.0
    %360 = vmatmul.mubr.f32.gmra.mrb[0].mxu0 %v284
    %v361 = vpop.f32.mrb[0].mxu0
    %v362 = vadd.f32 0.0, %v361
    %v363 = vpop.f32.mrb[0].mxu0
    %364 = vmatprep.mubr.f32.mxu0 0.0
    %365 = vmatmul.mubr.f32.gmra.mrb[0].mxu0 %v287
    %v366 = vpop.f32.mrb[0].mxu0
    %v367 = vadd.f32 0.0, %v366
    %v368 = vpop.f32.mrb[0].mxu0
    %369 = vmatprep.mubr.f32.mxu0 0.0
    %370 = vmatmul.mubr.f32.gmra.mrb[0].mxu0 %v290
    %v371 = vpop.f32.mrb[0].mxu0
    %v372 = vadd.f32 0.0, %v371
    %v373 = vpop.f32.mrb[0].mxu0
    %374 = vmatprep.mubr.f32.mxu0 0.0
    %375 = vmatmul.mubr.f32.gmra.mrb[0].mxu0 %v293
    %v376 = vpop.f32.mrb[0].mxu0
    %v377 = vadd.f32 0.0, %v376
    %v378 = vpop.f32.mrb[0].mxu0
    %379 = vdwg.mxu0
    %v380 = vadd.f32 %v254, %v362
    %v381 = vadd.f32 %v259, %v367
    %v382 = vadd.f32 %v264, %v372
    %v383 = vadd.f32 %v269, %v377
    %v384 = vld [vmem:[%s2] sm:$0x1]
    %v386 = vlaneseq
    %v387 = vshrl.u32 %v386, 7
    %v388 = vsub.s32 0, %v387
    %v389 = vrot.slane %v384, %v388
    %v391 = vadd.f32 %v380, %v389
    %v392 = vadd.f32 %v381, %v389
    %v393 = vadd.f32 %v382, %v389
    %v394 = vadd.f32 %v383, %v389
    %v395 = vmax.f32 %v391, 0.0
    %v396 = vmax.f32 %v392, 0.0
    %v397 = vmax.f32 %v393, 0.0
    %v398 = vmax.f32 %v394, 0.0
    %403 = vrot.lane.b32.xlu0 %v395, 120
    %v404 = vpop.permute.xlu0 %403
    %405 = vrot.lane.b32.xlu0 %v396, 120
    %v406 = vpop.permute.xlu0 %405
    %407 = vrot.lane.b32.xlu0 %v397, 120
    %v408 = vpop.permute.xlu0 %407
    %409 = vrot.lane.b32.xlu0 %v398, 120
    %v410 = vpop.permute.xlu0 %409
    %v415 = vmax.f32 %v395, %v404
    %v416 = vmax.f32 %v396, %v406
    %v417 = vmax.f32 %v397, %v408
    %v418 = vmax.f32 %v398, %v410
    %vm419 = vcmask 982016
    %420 = vst.msk [vmem:[#allocation5] sm:$0xff] %vm419, %v415
    %421 = vst.msk [vmem:[#allocation5 + $0x8] sm:$0xff] %vm419, %v416
    %422 = vst.msk [vmem:[#allocation5 + $0x10] sm:$0xff] %vm419, %v417
    %423 = vst.msk [vmem:[#allocation5 + $0x18] sm:$0xff] %vm419, %v418
    %v424 = vld [vmem:[#allocation5] ss:$2 sm:$0xff]
    %s425 = scalar_lea.vmem [#allocation5], 16
    %v426 = vld [vmem:[%s425] ss:$2 sm:$0xff]
    %s427 = scalar_lea.vmem [#allocation5], 1
    %v428 = vld [vmem:[%s427] ss:$2 sm:$0xff]
    %s429 = scalar_lea.vmem [#allocation5], 17
    %v430 = vld [vmem:[%s429] ss:$2 sm:$0xff]
    %v431 = vmax.f32 %v424, %v428
    %v432 = vmax.f32 %v426, %v430
    %433 = vst.msk [vmem:[#allocation3 + $0x1] sm:$0xff] %vm419, %v431
    %434 = vst.msk [vmem:[#allocation3 + $0x11] sm:$0xff] %vm419, %v432
    %v435 = vld [vmem:[#allocation3] sm:$0xff]
    %v436 = vld [vmem:[#allocation3 + $0x10] sm:$0xff]
    %v437 = vld [vmem:[%s3] sm:$0xff]
    %v438 = vld [vmem:[%s3 + $0x8] sm:$0xff]
    %v439 = vld [vmem:[%s3 + $0x10] sm:$0xff]
    %v440 = vld [vmem:[%s3 + $0x18] sm:$0xff]
    %v441 = vld [vmem:[%s3 + $0x20] sm:$0xff]
    %v442 = vld [vmem:[%s3 + $0x28] sm:$0xff]
    %v443 = vld [vmem:[%s3 + $0x30] sm:$0xff]
    %v444 = vld [vmem:[%s3 + $0x38] sm:$0xff]
    %v445 = vld [vmem:[%s3 + $0x40] sm:$0xff]
    %v446 = vld [vmem:[%s3 + $0x48] sm:$0xff]
    %v447 = vld [vmem:[%s3 + $0x50] sm:$0xff]
    %v448 = vld [vmem:[%s3 + $0x58] sm:$0xff]
    %v449 = vld [vmem:[%s3 + $0x60] sm:$0xff]
    %v450 = vld [vmem:[%s3 + $0x68] sm:$0xff]
    %v451 = vld [vmem:[%s3 + $0x70] sm:$0xff]
    %v452 = vld [vmem:[#allocation3 + $0x1] sm:$0xff]
    %v453 = vld [vmem:[#allocation3 + $0x11] sm:$0xff]
    %s454 = scalar_lea.vmem %s3, 120
    %v455 = vld [vmem:[%s454] sm:$0xff]
    %v456 = vld [vmem:[%s454 + $0x8] sm:$0xff]
    %v457 = vld [vmem:[%s454 + $0x10] sm:$0xff]
    %v458 = vld [vmem:[%s454 + $0x18] sm:$0xff]
    %v459 = vld [vmem:[%s454 + $0x20] sm:$0xff]
    %v460 = vld [vmem:[%s454 + $0x28] sm:$0xff]
    %v461 = vld [vmem:[%s454 + $0x30] sm:$0xff]
    %v462 = vld [vmem:[%s454 + $0x38] sm:$0xff]
    %v463 = vld [vmem:[%s454 + $0x40] sm:$0xff]
    %v464 = vld [vmem:[%s454 + $0x48] sm:$0xff]
    %v465 = vld [vmem:[%s454 + $0x50] sm:$0xff]
    %v466 = vld [vmem:[%s454 + $0x58] sm:$0xff]
    %v467 = vld [vmem:[%s454 + $0x60] sm:$0xff]
    %v468 = vld [vmem:[%s454 + $0x68] sm:$0xff]
    %v469 = vld [vmem:[%s454 + $0x70] sm:$0xff]
    %v471 = vsel %vm419, %v452, 0
    %v474 = vsel %vm419, %v453, 0
    %476 = vmatprep.subr.mxu0 0.0
    %477 = vmatpush1.msra.mxu0 %v455
    %478 = vmatprep.subr.mxu0 0.0
    %479 = vmatpush1.msra.mxu0 %v456
    %480 = vmatprep.subr.mxu0 0.0
    %481 = vmatpush1.msra.mxu0 %v457
    %482 = vmatprep.subr.mxu0 0.0
    %483 = vmatpush1.msra.mxu0 %v458
    %484 = vmatprep.subr.mxu0 0.0
    %485 = vmatpush1.msra.mxu0 %v459
    %486 = vmatprep.subr.mxu0 0.0
    %487 = vmatpush1.msra.mxu0 %v460
    %488 = vmatprep.subr.mxu0 0.0
    %489 = vmatpush1.msra.mxu0 %v461
    %490 = vmatprep.subr.mxu0 0.0
    %491 = vmatpush1.msra.mxu0 %v462
    %492 = vmatprep.subr.mxu0 0.0
    %493 = vmatpush1.msra.mxu0 %v463
    %494 = vmatprep.subr.mxu0 0.0
    %495 = vmatpush1.msra.mxu0 %v464
    %496 = vmatprep.subr.mxu0 0.0
    %497 = vmatpush1.msra.mxu0 %v465
    %498 = vmatprep.subr.mxu0 0.0
    %499 = vmatpush1.msra.mxu0 %v466
    %500 = vmatprep.subr.mxu0 0.0
    %501 = vmatpush1.msra.mxu0 %v467
    %502 = vmatprep.subr.mxu0 0.0
    %503 = vmatpush1.msra.mxu0 %v468
    %504 = vmatprep.subr.mxu0 0.0
    %505 = vmatpush1.msra.mxu0 %v469
    %506 = vmatprep.subr.mxu0 0.0
    %507 = vmatpush1.msra.mxu0 0.0
    %508 = vmatprep.subr.mxu0 0.0
    %509 = vmatpush1.msra.mxu0 0.0
    %510 = vmatprep.subr.mxu0 0.0
    %511 = vmatpush1.msra.mxu0 0.0
    %512 = vmatprep.subr.mxu0 0.0
    %513 = vmatpush1.msra.mxu0 0.0
    %514 = vmatprep.subr.mxu0 0.0
    %515 = vmatpush1.msra.mxu0 0.0
    %516 = vmatprep.subr.mxu0 0.0
    %517 = vmatpush1.msra.mxu0 0.0
    %518 = vmatprep.subr.mxu0 0.0
    %519 = vmatpush1.msra.mxu0 0.0
    %520 = vmatprep.subr.mxu0 0.0
    %521 = vmatpush1.msra.mxu0 0.0
    %522 = vmatprep.subr.mxu0 0.0
    %523 = vmatpush1.msra.mxu0 0.0
    %524 = vmatprep.subr.mxu0 0.0
    %525 = vmatpush1.msra.mxu0 0.0
    %526 = vmatprep.subr.mxu0 0.0
    %527 = vmatpush1.msra.mxu0 0.0
    %528 = vmatprep.subr.mxu0 0.0
    %529 = vmatpush1.msra.mxu0 0.0
    %530 = vmatprep.subr.mxu0 0.0
    %531 = vmatpush1.msra.mxu0 0.0
    %532 = vmatprep.subr.mxu0 0.0
    %533 = vmatpush1.msra.mxu0 0.0
    %534 = vmatprep.subr.mxu0 0.0
    %535 = vmatpush1.msra.mxu0 0.0
    %536 = vmatprep.subr.mxu0 0.0
    %537 = vmatpush1.msra.mxu0 0.0
    %538 = vmatprep.subr.mxu0 0.0
    %539 = vmatpush1.msra.mxu0 0.0
    %540 = vmatprep.mubr.f32.mxu0 0.0
    %541 = vmatmul.mubr.f32.gmra.mrb[0].mxu0 %v471
    %v542 = vpop.f32.mrb[0].mxu0
    %v543 = vadd.f32 0.0, %v542
    %v544 = vpop.f32.mrb[0].mxu0
    %545 = vmatprep.mubr.f32.mxu0 0.0
    %546 = vmatmul.mubr.f32.gmra.mrb[0].mxu0 %v474
    %v547 = vpop.f32.mrb[0].mxu0
    %v548 = vadd.f32 0.0, %v547
    %v549 = vpop.f32.mrb[0].mxu0
    %550 = vdwg.mxu0
    %v552 = vsel %vm419, %v435, 0
    %v555 = vsel %vm419, %v436, 0
    %557 = vmatprep.subr.mxu0 0.0
    %558 = vmatpush1.msra.mxu0 %v437
    %559 = vmatprep.subr.mxu0 0.0
    %560 = vmatpush1.msra.mxu0 %v438
    %561 = vmatprep.subr.mxu0 0.0
    %562 = vmatpush1.msra.mxu0 %v439
    %563 = vmatprep.subr.mxu0 0.0
    %564 = vmatpush1.msra.mxu0 %v440
    %565 = vmatprep.subr.mxu0 0.0
    %566 = vmatpush1.msra.mxu0 %v441
    %567 = vmatprep.subr.mxu0 0.0
    %568 = vmatpush1.msra.mxu0 %v442
    %569 = vmatprep.subr.mxu0 0.0
    %570 = vmatpush1.msra.mxu0 %v443
    %571 = vmatprep.subr.mxu0 0.0
    %572 = vmatpush1.msra.mxu0 %v444
    %573 = vmatprep.subr.mxu0 0.0
    %574 = vmatpush1.msra.mxu0 %v445
    %575 = vmatprep.subr.mxu0 0.0
    %576 = vmatpush1.msra.mxu0 %v446
    %577 = vmatprep.subr.mxu0 0.0
    %578 = vmatpush1.msra.mxu0 %v447
    %579 = vmatprep.subr.mxu0 0.0
    %580 = vmatpush1.msra.mxu0 %v448
    %581 = vmatprep.subr.mxu0 0.0
    %582 = vmatpush1.msra.mxu0 %v449
    %583 = vmatprep.subr.mxu0 0.0
    %584 = vmatpush1.msra.mxu0 %v450
    %585 = vmatprep.subr.mxu0 0.0
    %586 = vmatpush1.msra.mxu0 %v451
    %587 = vmatprep.subr.mxu0 0.0
    %588 = vmatpush1.msra.mxu0 0.0
    %589 = vmatprep.subr.mxu0 0.0
    %590 = vmatpush1.msra.mxu0 0.0
    %591 = vmatprep.subr.mxu0 0.0
    %592 = vmatpush1.msra.mxu0 0.0
    %593 = vmatprep.subr.mxu0 0.0
    %594 = vmatpush1.msra.mxu0 0.0
    %595 = vmatprep.subr.mxu0 0.0
    %596 = vmatpush1.msra.mxu0 0.0
    %597 = vmatprep.subr.mxu0 0.0
    %598 = vmatpush1.msra.mxu0 0.0
    %599 = vmatprep.subr.mxu0 0.0
    %600 = vmatpush1.msra.mxu0 0.0
    %601 = vmatprep.subr.mxu0 0.0
    %602 = vmatpush1.msra.mxu0 0.0
    %603 = vmatprep.subr.mxu0 0.0
    %604 = vmatpush1.msra.mxu0 0.0
    %605 = vmatprep.subr.mxu0 0.0
    %606 = vmatpush1.msra.mxu0 0.0
    %607 = vmatprep.subr.mxu0 0.0
    %608 = vmatpush1.msra.mxu0 0.0
    %609 = vmatprep.subr.mxu0 0.0
    %610 = vmatpush1.msra.mxu0 0.0
    %611 = vmatprep.subr.mxu0 0.0
    %612 = vmatpush1.msra.mxu0 0.0
    %613 = vmatprep.subr.mxu0 0.0
    %614 = vmatpush1.msra.mxu0 0.0
    %615 = vmatprep.subr.mxu0 0.0
    %616 = vmatpush1.msra.mxu0 0.0
    %617 = vmatprep.subr.mxu0 0.0
    %618 = vmatpush1.msra.mxu0 0.0
    %619 = vmatprep.subr.mxu0 0.0
    %620 = vmatpush1.msra.mxu0 0.0
    %621 = vmatprep.mubr.f32.mxu0 0.0
    %622 = vmatmul.mubr.f32.gmra.mrb[0].mxu0 %v552
    %v623 = vpop.f32.mrb[0].mxu0
    %v624 = vadd.f32 %v543, %v623
    %v625 = vpop.f32.mrb[0].mxu0
    %626 = vmatprep.mubr.f32.mxu0 0.0
    %627 = vmatmul.mubr.f32.gmra.mrb[0].mxu0 %v555
    %v628 = vpop.f32.mrb[0].mxu0
    %v629 = vadd.f32 %v548, %v628
    %v630 = vpop.f32.mrb[0].mxu0
    %631 = vdwg.mxu0
    %v632 = vld [vmem:[#allocation3 + $0x2] sm:$0xff]
    %v633 = vld [vmem:[#allocation3 + $0x12] sm:$0xff]
    %s634 = scalar_lea.vmem %s3, 240
    %v635 = vld [vmem:[%s634] sm:$0xff]
    %v636 = vld [vmem:[%s634 + $0x8] sm:$0xff]
    %v637 = vld [vmem:[%s634 + $0x10] sm:$0xff]
    %v638 = vld [vmem:[%s634 + $0x18] sm:$0xff]
    %v639 = vld [vmem:[%s634 + $0x20] sm:$0xff]
    %v640 = vld [vmem:[%s634 + $0x28] sm:$0xff]
    %v641 = vld [vmem:[%s634 + $0x30] sm:$0xff]
    %v642 = vld [vmem:[%s634 + $0x38] sm:$0xff]
    %v643 = vld [vmem:[%s634 + $0x40] sm:$0xff]
    %v644 = vld [vmem:[%s634 + $0x48] sm:$0xff]
    %v645 = vld [vmem:[%s634 + $0x50] sm:$0xff]
    %v646 = vld [vmem:[%s634 + $0x58] sm:$0xff]
    %v647 = vld [vmem:[%s634 + $0x60] sm:$0xff]
    %v648 = vld [vmem:[%s634 + $0x68] sm:$0xff]
    %v649 = vld [vmem:[%s634 + $0x70] sm:$0xff]
    %v651 = vsel %vm419, %v632, 0
    %v654 = vsel %vm419, %v633, 0
    %656 = vmatprep.subr.mxu0 0.0
    %657 = vmatpush1.msra.mxu0 %v635
    %658 = vmatprep.subr.mxu0 0.0
    %659 = vmatpush1.msra.mxu0 %v636
    %660 = vmatprep.subr.mxu0 0.0
    %661 = vmatpush1.msra.mxu0 %v637
    %662 = vmatprep.subr.mxu0 0.0
    %663 = vmatpush1.msra.mxu0 %v638
    %664 = vmatprep.subr.mxu0 0.0
    %665 = vmatpush1.msra.mxu0 %v639
    %666 = vmatprep.subr.mxu0 0.0
    %667 = vmatpush1.msra.mxu0 %v640
    %668 = vmatprep.subr.mxu0 0.0
    %669 = vmatpush1.msra.mxu0 %v641
    %670 = vmatprep.subr.mxu0 0.0
    %671 = vmatpush1.msra.mxu0 %v642
    %672 = vmatprep.subr.mxu0 0.0
    %673 = vmatpush1.msra.mxu0 %v643
    %674 = vmatprep.subr.mxu0 0.0
    %675 = vmatpush1.msra.mxu0 %v644
    %676 = vmatprep.subr.mxu0 0.0
    %677 = vmatpush1.msra.mxu0 %v645
    %678 = vmatprep.subr.mxu0 0.0
    %679 = vmatpush1.msra.mxu0 %v646
    %680 = vmatprep.subr.mxu0 0.0
    %681 = vmatpush1.msra.mxu0 %v647
    %682 = vmatprep.subr.mxu0 0.0
    %683 = vmatpush1.msra.mxu0 %v648
    %684 = vmatprep.subr.mxu0 0.0
    %685 = vmatpush1.msra.mxu0 %v649
    %686 = vmatprep.subr.mxu0 0.0
    %687 = vmatpush1.msra.mxu0 0.0
    %688 = vmatprep.subr.mxu0 0.0
    %689 = vmatpush1.msra.mxu0 0.0
    %690 = vmatprep.subr.mxu0 0.0
    %691 = vmatpush1.msra.mxu0 0.0
    %692 = vmatprep.subr.mxu0 0.0
    %693 = vmatpush1.msra.mxu0 0.0
    %694 = vmatprep.subr.mxu0 0.0
    %695 = vmatpush1.msra.mxu0 0.0
    %696 = vmatprep.subr.mxu0 0.0
    %697 = vmatpush1.msra.mxu0 0.0
    %698 = vmatprep.subr.mxu0 0.0
    %699 = vmatpush1.msra.mxu0 0.0
    %700 = vmatprep.subr.mxu0 0.0
    %701 = vmatpush1.msra.mxu0 0.0
    %702 = vmatprep.subr.mxu0 0.0
    %703 = vmatpush1.msra.mxu0 0.0
    %704 = vmatprep.subr.mxu0 0.0
    %705 = vmatpush1.msra.mxu0 0.0
    %706 = vmatprep.subr.mxu0 0.0
    %707 = vmatpush1.msra.mxu0 0.0
    %708 = vmatprep.subr.mxu0 0.0
    %709 = vmatpush1.msra.mxu0 0.0
    %710 = vmatprep.subr.mxu0 0.0
    %711 = vmatpush1.msra.mxu0 0.0
    %712 = vmatprep.subr.mxu0 0.0
    %713 = vmatpush1.msra.mxu0 0.0
    %714 = vmatprep.subr.mxu0 0.0
    %715 = vmatpush1.msra.mxu0 0.0
    %716 = vmatprep.subr.mxu0 0.0
    %717 = vmatpush1.msra.mxu0 0.0
    %718 = vmatprep.subr.mxu0 0.0
    %719 = vmatpush1.msra.mxu0 0.0
    %720 = vmatprep.mubr.f32.mxu0 0.0
    %721 = vmatmul.mubr.f32.gmra.mrb[0].mxu0 %v651
    %v722 = vpop.f32.mrb[0].mxu0
    %v723 = vadd.f32 0.0, %v722
    %v724 = vpop.f32.mrb[0].mxu0
    %725 = vmatprep.mubr.f32.mxu0 0.0
    %726 = vmatmul.mubr.f32.gmra.mrb[0].mxu0 %v654
    %v727 = vpop.f32.mrb[0].mxu0
    %v728 = vadd.f32 0.0, %v727
    %v729 = vpop.f32.mrb[0].mxu0
    %730 = vdwg.mxu0
    %v731 = vadd.f32 %v624, %v723
    %v732 = vadd.f32 %v629, %v728
    %v733 = vld [vmem:[%s4] sm:$0x1]
    %v735 = vlaneseq
    %v736 = vshrl.u32 %v735, 7
    %v737 = vsub.s32 0, %v736
    %v738 = vrot.slane %v733, %v737
    %v740 = vadd.f32 %v731, %v738
    %v741 = vadd.f32 %v732, %v738
    %v742 = vmax.f32 %v740, 0.0
    %v743 = vmax.f32 %v741, 0.0
    %746 = vrot.lane.b32.xlu0 %v742, 120
    %v747 = vpop.permute.xlu0 %746
    %748 = vrot.lane.b32.xlu0 %v743, 120
    %v749 = vpop.permute.xlu0 %748
    %v752 = vmax.f32 %v742, %v747
    %v753 = vmax.f32 %v743, %v749
    %vm754 = vcmask 457728
    %755 = vst.msk [vmem:[#allocation6] sm:$0xff] %vm754, %v752
    %756 = vst.msk [vmem:[#allocation6 + $0x8] sm:$0xff] %vm754, %v753
    %v757 = vld [vmem:[#allocation6] ss:$2 sm:$0xff]
    %s758 = scalar_lea.vmem [#allocation6], 1
    %v759 = vld [vmem:[%s758] ss:$2 sm:$0xff]
    %v760 = vmax.f32 %v757, %v759
    %v762 = vcombine.high %v760, %v760
    %vm764 = vcmask 453632
    %765 = vst.msk [vmem:[#allocation4 + $0x1] sm:$0xf] %vm764, %v760
    %766 = vst.msk [vmem:[#allocation4 + $0x9] sm:$0xf] %vm764, %v762
    %v767 = vld [vmem:[#allocation4] sm:$0xf]
    %v768 = vld [vmem:[#allocation4 + $0x8] sm:$0xf]
    %v769 = vld [vmem:[%s5] sm:$0xff]
    %v770 = vld [vmem:[%s5 + $0x8] sm:$0xff]
    %v771 = vld [vmem:[%s5 + $0x10] sm:$0xff]
    %v772 = vld [vmem:[%s5 + $0x18] sm:$0xff]
    %v773 = vld [vmem:[%s5 + $0x20] sm:$0xff]
    %v774 = vld [vmem:[%s5 + $0x28] sm:$0xff]
    %v775 = vld [vmem:[%s5 + $0x30] sm:$0xff]
    %v776 = vld [vmem:[#allocation4 + $0x1] sm:$0xf]
    %v777 = vld [vmem:[#allocation4 + $0x9] sm:$0xf]
    %s778 = scalar_lea.vmem %s5, 56
    %v779 = vld [vmem:[%s778] sm:$0xff]
    %v780 = vld [vmem:[%s778 + $0x8] sm:$0xff]
    %v781 = vld [vmem:[%s778 + $0x10] sm:$0xff]
    %v782 = vld [vmem:[%s778 + $0x18] sm:$0xff]
    %v783 = vld [vmem:[%s778 + $0x20] sm:$0xff]
    %v784 = vld [vmem:[%s778 + $0x28] sm:$0xff]
    %v785 = vld [vmem:[%s778 + $0x30] sm:$0xff]
    %v788 = vcombine.low %v776, %v777
    %v789 = vsel %vm754, %v788, 0
    %791 = vmatprep.subr.mxu0 0.0
    %792 = vmatpush1.msra.mxu0 %v779
    %793 = vmatprep.subr.mxu0 0.0
    %794 = vmatpush1.msra.mxu0 %v780
    %795 = vmatprep.subr.mxu0 0.0
    %796 = vmatpush1.msra.mxu0 %v781
    %797 = vmatprep.subr.mxu0 0.0
    %798 = vmatpush1.msra.mxu0 %v782
    %799 = vmatprep.subr.mxu0 0.0
    %800 = vmatpush1.msra.mxu0 %v783
    %801 = vmatprep.subr.mxu0 0.0
    %802 = vmatpush1.msra.mxu0 %v784
    %803 = vmatprep.subr.mxu0 0.0
    %804 = vmatpush1.msra.mxu0 %v785
    %805 = vmatprep.subr.mxu0 0.0
    %806 = vmatpush1.msra.mxu0 0.0
    %807 = vmatprep.subr.mxu0 0.0
    %808 = vmatpush1.msra.mxu0 0.0
    %809 = vmatprep.subr.mxu0 0.0
    %810 = vmatpush1.msra.mxu0 0.0
    %811 = vmatprep.subr.mxu0 0.0
    %812 = vmatpush1.msra.mxu0 0.0
    %813 = vmatprep.subr.mxu0 0.0
    %814 = vmatpush1.msra.mxu0 0.0
    %815 = vmatprep.subr.mxu0 0.0
    %816 = vmatpush1.msra.mxu0 0.0
    %817 = vmatprep.subr.mxu0 0.0
    %818 = vmatpush1.msra.mxu0 0.0
    %819 = vmatprep.subr.mxu0 0.0
    %820 = vmatpush1.msra.mxu0 0.0
    %821 = vmatprep.subr.mxu0 0.0
    %822 = vmatpush1.msra.mxu0 0.0
    %823 = vmatprep.subr.mxu0 0.0
    %824 = vmatpush1.msra.mxu0 0.0
    %825 = vmatprep.subr.mxu0 0.0
    %826 = vmatpush1.msra.mxu0 0.0
    %827 = vmatprep.subr.mxu0 0.0
    %828 = vmatpush1.msra.mxu0 0.0
    %829 = vmatprep.subr.mxu0 0.0
    %830 = vmatpush1.msra.mxu0 0.0
    %831 = vmatprep.subr.mxu0 0.0
    %832 = vmatpush1.msra.mxu0 0.0
    %833 = vmatprep.subr.mxu0 0.0
    %834 = vmatpush1.msra.mxu0 0.0
    %835 = vmatprep.subr.mxu0 0.0
    %836 = vmatpush1.msra.mxu0 0.0
    %837 = vmatprep.subr.mxu0 0.0
    %838 = vmatpush1.msra.mxu0 0.0
    %839 = vmatprep.subr.mxu0 0.0
    %840 = vmatpush1.msra.mxu0 0.0
    %841 = vmatprep.subr.mxu0 0.0
    %842 = vmatpush1.msra.mxu0 0.0
    %843 = vmatprep.subr.mxu0 0.0
    %844 = vmatpush1.msra.mxu0 0.0
    %845 = vmatprep.subr.mxu0 0.0
    %846 = vmatpush1.msra.mxu0 0.0
    %847 = vmatprep.subr.mxu0 0.0
    %848 = vmatpush1.msra.mxu0 0.0
    %849 = vmatprep.subr.mxu0 0.0
    %850 = vmatpush1.msra.mxu0 0.0
    %851 = vmatprep.subr.mxu0 0.0
    %852 = vmatpush1.msra.mxu0 0.0
    %853 = vmatprep.subr.mxu0 0.0
    %854 = vmatpush1.msra.mxu0 0.0
    %855 = vmatprep.mubr.f32.mxu0 0.0
    %856 = vmatmul.mubr.f32.gmra.mrb[0].mxu0 %v789
    %v857 = vpop.f32.mrb[0].mxu0
    %v858 = vadd.f32 0.0, %v857
    %v859 = vpop.f32.mrb[0].mxu0
    %860 = vdwg.mxu0
    %v863 = vcombine.low %v767, %v768
    %v864 = vsel %vm754, %v863, 0
    %866 = vmatprep.subr.mxu0 0.0
    %867 = vmatpush1.msra.mxu0 %v769
    %868 = vmatprep.subr.mxu0 0.0
    %869 = vmatpush1.msra.mxu0 %v770
    %870 = vmatprep.subr.mxu0 0.0
    %871 = vmatpush1.msra.mxu0 %v771
    %872 = vmatprep.subr.mxu0 0.0
    %873 = vmatpush1.msra.mxu0 %v772
    %874 = vmatprep.subr.mxu0 0.0
    %875 = vmatpush1.msra.mxu0 %v773
    %876 = vmatprep.subr.mxu0 0.0
    %877 = vmatpush1.msra.mxu0 %v774
    %878 = vmatprep.subr.mxu0 0.0
    %879 = vmatpush1.msra.mxu0 %v775
    %880 = vmatprep.subr.mxu0 0.0
    %881 = vmatpush1.msra.mxu0 0.0
    %882 = vmatprep.subr.mxu0 0.0
    %883 = vmatpush1.msra.mxu0 0.0
    %884 = vmatprep.subr.mxu0 0.0
    %885 = vmatpush1.msra.mxu0 0.0
    %886 = vmatprep.subr.mxu0 0.0
    %887 = vmatpush1.msra.mxu0 0.0
    %888 = vmatprep.subr.mxu0 0.0
    %889 = vmatpush1.msra.mxu0 0.0
    %890 = vmatprep.subr.mxu0 0.0
    %891 = vmatpush1.msra.mxu0 0.0
    %892 = vmatprep.subr.mxu0 0.0
    %893 = vmatpush1.msra.mxu0 0.0
    %894 = vmatprep.subr.mxu0 0.0
    %895 = vmatpush1.msra.mxu0 0.0
    %896 = vmatprep.subr.mxu0 0.0
    %897 = vmatpush1.msra.mxu0 0.0
    %898 = vmatprep.subr.mxu0 0.0
    %899 = vmatpush1.msra.mxu0 0.0
    %900 = vmatprep.subr.mxu0 0.0
    %901 = vmatpush1.msra.mxu0 0.0
    %902 = vmatprep.subr.mxu0 0.0
    %903 = vmatpush1.msra.mxu0 0.0
    %904 = vmatprep.subr.mxu0 0.0
    %905 = vmatpush1.msra.mxu0 0.0
    %906 = vmatprep.subr.mxu0 0.0
    %907 = vmatpush1.msra.mxu0 0.0
    %908 = vmatprep.subr.mxu0 0.0
    %909 = vmatpush1.msra.mxu0 0.0
    %910 = vmatprep.subr.mxu0 0.0
    %911 = vmatpush1.msra.mxu0 0.0
    %912 = vmatprep.subr.mxu0 0.0
    %913 = vmatpush1.msra.mxu0 0.0
    %914 = vmatprep.subr.mxu0 0.0
    %915 = vmatpush1.msra.mxu0 0.0
    %916 = vmatprep.subr.mxu0 0.0
    %917 = vmatpush1.msra.mxu0 0.0
    %918 = vmatprep.subr.mxu0 0.0
    %919 = vmatpush1.msra.mxu0 0.0
    %920 = vmatprep.subr.mxu0 0.0
    %921 = vmatpush1.msra.mxu0 0.0
    %922 = vmatprep.subr.mxu0 0.0
    %923 = vmatpush1.msra.mxu0 0.0
    %924 = vmatprep.subr.mxu0 0.0
    %925 = vmatpush1.msra.mxu0 0.0
    %926 = vmatprep.subr.mxu0 0.0
    %927 = vmatpush1.msra.mxu0 0.0
    %928 = vmatprep.subr.mxu0 0.0
    %929 = vmatpush1.msra.mxu0 0.0
    %930 = vmatprep.mubr.f32.mxu0 0.0
    %931 = vmatmul.mubr.f32.gmra.mrb[0].mxu0 %v864
    %v932 = vpop.f32.mrb[0].mxu0
    %v933 = vadd.f32 %v858, %v932
    %v934 = vpop.f32.mrb[0].mxu0
    %935 = vdwg.mxu0
    %v936 = vld [vmem:[#allocation4 + $0x2] sm:$0xf]
    %v937 = vld [vmem:[#allocation4 + $0xa] sm:$0xf]
    %s938 = scalar_lea.vmem %s5, 112
    %v939 = vld [vmem:[%s938] sm:$0xff]
    %v940 = vld [vmem:[%s938 + $0x8] sm:$0xff]
    %v941 = vld [vmem:[%s938 + $0x10] sm:$0xff]
    %v942 = vld [vmem:[%s938 + $0x18] sm:$0xff]
    %v943 = vld [vmem:[%s938 + $0x20] sm:$0xff]
    %v944 = vld [vmem:[%s938 + $0x28] sm:$0xff]
    %v945 = vld [vmem:[%s938 + $0x30] sm:$0xff]
    %v948 = vcombine.low %v936, %v937
    %v949 = vsel %vm754, %v948, 0
    %951 = vmatprep.subr.mxu0 0.0
    %952 = vmatpush1.msra.mxu0 %v939
    %953 = vmatprep.subr.mxu0 0.0
    %954 = vmatpush1.msra.mxu0 %v940
    %955 = vmatprep.subr.mxu0 0.0
    %956 = vmatpush1.msra.mxu0 %v941
    %957 = vmatprep.subr.mxu0 0.0
    %958 = vmatpush1.msra.mxu0 %v942
    %959 = vmatprep.subr.mxu0 0.0
    %960 = vmatpush1.msra.mxu0 %v943
    %961 = vmatprep.subr.mxu0 0.0
    %962 = vmatpush1.msra.mxu0 %v944
    %963 = vmatprep.subr.mxu0 0.0
    %964 = vmatpush1.msra.mxu0 %v945
    %965 = vmatprep.subr.mxu0 0.0
    %966 = vmatpush1.msra.mxu0 0.0
    %967 = vmatprep.subr.mxu0 0.0
    %968 = vmatpush1.msra.mxu0 0.0
    %969 = vmatprep.subr.mxu0 0.0
    %970 = vmatpush1.msra.mxu0 0.0
    %971 = vmatprep.subr.mxu0 0.0
    %972 = vmatpush1.msra.mxu0 0.0
    %973 = vmatprep.subr.mxu0 0.0
    %974 = vmatpush1.msra.mxu0 0.0
    %975 = vmatprep.subr.mxu0 0.0
    %976 = vmatpush1.msra.mxu0 0.0
    %977 = vmatprep.subr.mxu0 0.0
    %978 = vmatpush1.msra.mxu0 0.0
    %979 = vmatprep.subr.mxu0 0.0
    %980 = vmatpush1.msra.mxu0 0.0
    %981 = vmatprep.subr.mxu0 0.0
    %982 = vmatpush1.msra.mxu0 0.0
    %983 = vmatprep.subr.mxu0 0.0
    %984 = vmatpush1.msra.mxu0 0.0
    %985 = vmatprep.subr.mxu0 0.0
    %986 = vmatpush1.msra.mxu0 0.0
    %987 = vmatprep.subr.mxu0 0.0
    %988 = vmatpush1.msra.mxu0 0.0
    %989 = vmatprep.subr.mxu0 0.0
    %990 = vmatpush1.msra.mxu0 0.0
    %991 = vmatprep.subr.mxu0 0.0
    %992 = vmatpush1.msra.mxu0 0.0
    %993 = vmatprep.subr.mxu0 0.0
    %994 = vmatpush1.msra.mxu0 0.0
    %995 = vmatprep.subr.mxu0 0.0
    %996 = vmatpush1.msra.mxu0 0.0
    %997 = vmatprep.subr.mxu0 0.0
    %998 = vmatpush1.msra.mxu0 0.0
    %999 = vmatprep.subr.mxu0 0.0
    %1000 = vmatpush1.msra.mxu0 0.0
    %1001 = vmatprep.subr.mxu0 0.0
    %1002 = vmatpush1.msra.mxu0 0.0
    %1003 = vmatprep.subr.mxu0 0.0
    %1004 = vmatpush1.msra.mxu0 0.0
    %1005 = vmatprep.subr.mxu0 0.0
    %1006 = vmatpush1.msra.mxu0 0.0
    %1007 = vmatprep.subr.mxu0 0.0
    %1008 = vmatpush1.msra.mxu0 0.0
    %1009 = vmatprep.subr.mxu0 0.0
    %1010 = vmatpush1.msra.mxu0 0.0
    %1011 = vmatprep.subr.mxu0 0.0
    %1012 = vmatpush1.msra.mxu0 0.0
    %1013 = vmatprep.subr.mxu0 0.0
    %1014 = vmatpush1.msra.mxu0 0.0
    %1015 = vmatprep.mubr.f32.mxu0 0.0
    %1016 = vmatmul.mubr.f32.gmra.mrb[0].mxu0 %v949
    %v1017 = vpop.f32.mrb[0].mxu0
    %v1018 = vadd.f32 0.0, %v1017
    %v1019 = vpop.f32.mrb[0].mxu0
    %1020 = vdwg.mxu0
    %v1021 = vadd.f32 %v933, %v1018
    %v1022 = vld [vmem:[%s6] sm:$0x1]
    %v1024 = vlaneseq
    %v1025 = vshrl.u32 %v1024, 7
    %v1026 = vsub.s32 0, %v1025
    %v1027 = vrot.slane %v1022, %v1026
    %v1029 = vadd.f32 %v1021, %v1027
    %v1030 = vmax.f32 %v1029, 0.0
    %1032 = vrot.lane.b32.xlu0 %v1030, 120
    %v1033 = vpop.permute.xlu0 %1032
    %v1035 = vmax.f32 %v1030, %v1033
    %vm1036 = vcmask 195584
    %1037 = vst.msk [vmem:[#allocation7] sm:$0xff] %vm1036, %v1035
    %v1038 = vld [vmem:[#allocation7] ss:$4 sm:$0x3]
    %s1039 = scalar_lea.vmem [#allocation7], 1
    %v1040 = vld [vmem:[%s1039] ss:$4 sm:$0x3]
    %v1041 = vmax.f32 %v1038, %v1040
    %v1042 = vld [vmem:[%s7] sm:$0xff]
    %v1043 = vld [vmem:[%s7 + $0x8] sm:$0xff]
    %v1044 = vld [vmem:[%s7 + $0x10] sm:$0xff]
    %s1045 = scalar_lea.vmem [#allocation7], 2
    %v1046 = vld [vmem:[%s1045] ss:$4 sm:$0x3]
    %s1047 = scalar_lea.vmem [#allocation7], 3
    %v1048 = vld [vmem:[%s1047] ss:$4 sm:$0x3]
    %v1049 = vmax.f32 %v1046, %v1048
    %s1050 = scalar_lea.vmem %s7, 24
    %v1051 = vld [vmem:[%s1050] sm:$0xff]
    %v1052 = vld [vmem:[%s1050 + $0x8] sm:$0xff]
    %v1053 = vld [vmem:[%s1050 + $0x10] sm:$0xff]
    %v1055 = vsel %vm1036, %v1049, 0
    %1057 = vmatprep.subr.mxu0 0.0
    %1058 = vmatpush1.msra.mxu0 %v1051
    %1059 = vmatprep.subr.mxu0 0.0
    %1060 = vmatpush1.msra.mxu0 %v1052
    %1061 = vmatprep.subr.mxu0 0.0
    %1062 = vmatpush1.msra.mxu0 %v1053
    %1063 = vmatprep.subr.mxu0 0.0
    %1064 = vmatpush1.msra.mxu0 0.0
    %1065 = vmatprep.subr.mxu0 0.0
    %1066 = vmatpush1.msra.mxu0 0.0
    %1067 = vmatprep.subr.mxu0 0.0
    %1068 = vmatpush1.msra.mxu0 0.0
    %1069 = vmatprep.subr.mxu0 0.0
    %1070 = vmatpush1.msra.mxu0 0.0
    %1071 = vmatprep.subr.mxu0 0.0
    %1072 = vmatpush1.msra.mxu0 0.0
    %1073 = vmatprep.subr.mxu0 0.0
    %1074 = vmatpush1.msra.mxu0 0.0
    %1075 = vmatprep.subr.mxu0 0.0
    %1076 = vmatpush1.msra.mxu0 0.0
    %1077 = vmatprep.subr.mxu0 0.0
    %1078 = vmatpush1.msra.mxu0 0.0
    %1079 = vmatprep.subr.mxu0 0.0
    %1080 = vmatpush1.msra.mxu0 0.0
    %1081 = vmatprep.subr.mxu0 0.0
    %1082 = vmatpush1.msra.mxu0 0.0
    %1083 = vmatprep.subr.mxu0 0.0
    %1084 = vmatpush1.msra.mxu0 0.0
    %1085 = vmatprep.subr.mxu0 0.0
    %1086 = vmatpush1.msra.mxu0 0.0
    %1087 = vmatprep.subr.mxu0 0.0
    %1088 = vmatpush1.msra.mxu0 0.0
    %1089 = vmatprep.subr.mxu0 0.0
    %1090 = vmatpush1.msra.mxu0 0.0
    %1091 = vmatprep.subr.mxu0 0.0
    %1092 = vmatpush1.msra.mxu0 0.0
    %1093 = vmatprep.subr.mxu0 0.0
    %1094 = vmatpush1.msra.mxu0 0.0
    %1095 = vmatprep.subr.mxu0 0.0
    %1096 = vmatpush1.msra.mxu0 0.0
    %1097 = vmatprep.subr.mxu0 0.0
    %1098 = vmatpush1.msra.mxu0 0.0
    %1099 = vmatprep.subr.mxu0 0.0
    %1100 = vmatpush1.msra.mxu0 0.0
    %1101 = vmatprep.subr.mxu0 0.0
    %1102 = vmatpush1.msra.mxu0 0.0
    %1103 = vmatprep.subr.mxu0 0.0
    %1104 = vmatpush1.msra.mxu0 0.0
    %1105 = vmatprep.subr.mxu0 0.0
    %1106 = vmatpush1.msra.mxu0 0.0
    %1107 = vmatprep.subr.mxu0 0.0
    %1108 = vmatpush1.msra.mxu0 0.0
    %1109 = vmatprep.subr.mxu0 0.0
    %1110 = vmatpush1.msra.mxu0 0.0
    %1111 = vmatprep.subr.mxu0 0.0
    %1112 = vmatpush1.msra.mxu0 0.0
    %1113 = vmatprep.subr.mxu0 0.0
    %1114 = vmatpush1.msra.mxu0 0.0
    %1115 = vmatprep.subr.mxu0 0.0
    %1116 = vmatpush1.msra.mxu0 0.0
    %1117 = vmatprep.subr.mxu0 0.0
    %1118 = vmatpush1.msra.mxu0 0.0
    %1119 = vmatprep.subr.mxu0 0.0
    %1120 = vmatpush1.msra.mxu0 0.0
    %1121 = vmatprep.mubr.f32.mxu0 0.0
    %1122 = vmatmul.mubr.f32.gmra.mrb[0].mxu0 %v1055
    %v1123 = vpop.f32.mrb[0].mxu0
    %v1124 = vadd.f32 0.0, %v1123
    %v1125 = vpop.f32.mrb[0].mxu0
    %1126 = vdwg.mxu0
    %v1128 = vsel %vm1036, %v1041, 0
    %1130 = vmatprep.subr.mxu0 0.0
    %1131 = vmatpush1.msra.mxu0 %v1042
    %1132 = vmatprep.subr.mxu0 0.0
    %1133 = vmatpush1.msra.mxu0 %v1043
    %1134 = vmatprep.subr.mxu0 0.0
    %1135 = vmatpush1.msra.mxu0 %v1044
    %1136 = vmatprep.subr.mxu0 0.0
    %1137 = vmatpush1.msra.mxu0 0.0
    %1138 = vmatprep.subr.mxu0 0.0
    %1139 = vmatpush1.msra.mxu0 0.0
    %1140 = vmatprep.subr.mxu0 0.0
    %1141 = vmatpush1.msra.mxu0 0.0
    %1142 = vmatprep.subr.mxu0 0.0
    %1143 = vmatpush1.msra.mxu0 0.0
    %1144 = vmatprep.subr.mxu0 0.0
    %1145 = vmatpush1.msra.mxu0 0.0
    %1146 = vmatprep.subr.mxu0 0.0
    %1147 = vmatpush1.msra.mxu0 0.0
    %1148 = vmatprep.subr.mxu0 0.0
    %1149 = vmatpush1.msra.mxu0 0.0
    %1150 = vmatprep.subr.mxu0 0.0
    %1151 = vmatpush1.msra.mxu0 0.0
    %1152 = vmatprep.subr.mxu0 0.0
    %1153 = vmatpush1.msra.mxu0 0.0
    %1154 = vmatprep.subr.mxu0 0.0
    %1155 = vmatpush1.msra.mxu0 0.0
    %1156 = vmatprep.subr.mxu0 0.0
    %1157 = vmatpush1.msra.mxu0 0.0
    %1158 = vmatprep.subr.mxu0 0.0
    %1159 = vmatpush1.msra.mxu0 0.0
    %1160 = vmatprep.subr.mxu0 0.0
    %1161 = vmatpush1.msra.mxu0 0.0
    %1162 = vmatprep.subr.mxu0 0.0
    %1163 = vmatpush1.msra.mxu0 0.0
    %1164 = vmatprep.subr.mxu0 0.0
    %1165 = vmatpush1.msra.mxu0 0.0
    %1166 = vmatprep.subr.mxu0 0.0
    %1167 = vmatpush1.msra.mxu0 0.0
    %1168 = vmatprep.subr.mxu0 0.0
    %1169 = vmatpush1.msra.mxu0 0.0
    %1170 = vmatprep.subr.mxu0 0.0
    %1171 = vmatpush1.msra.mxu0 0.0
    %1172 = vmatprep.subr.mxu0 0.0
    %1173 = vmatpush1.msra.mxu0 0.0
    %1174 = vmatprep.subr.mxu0 0.0
    %1175 = vmatpush1.msra.mxu0 0.0
    %1176 = vmatprep.subr.mxu0 0.0
    %1177 = vmatpush1.msra.mxu0 0.0
    %1178 = vmatprep.subr.mxu0 0.0
    %1179 = vmatpush1.msra.mxu0 0.0
    %1180 = vmatprep.subr.mxu0 0.0
    %1181 = vmatpush1.msra.mxu0 0.0
    %1182 = vmatprep.subr.mxu0 0.0
    %1183 = vmatpush1.msra.mxu0 0.0
    %1184 = vmatprep.subr.mxu0 0.0
    %1185 = vmatpush1.msra.mxu0 0.0
    %1186 = vmatprep.subr.mxu0 0.0
    %1187 = vmatpush1.msra.mxu0 0.0
    %1188 = vmatprep.subr.mxu0 0.0
    %1189 = vmatpush1.msra.mxu0 0.0
    %1190 = vmatprep.subr.mxu0 0.0
    %1191 = vmatpush1.msra.mxu0 0.0
    %1192 = vmatprep.subr.mxu0 0.0
    %1193 = vmatpush1.msra.mxu0 0.0
    %1194 = vmatprep.mubr.f32.mxu0 0.0
    %1195 = vmatmul.mubr.f32.gmra.mrb[0].mxu0 %v1128
    %v1196 = vpop.f32.mrb[0].mxu0
    %v1197 = vadd.f32 %v1124, %v1196
    %v1198 = vpop.f32.mrb[0].mxu0
    %1199 = vdwg.mxu0
    %v1200 = vld [vmem:[%s8] sm:$0x1]
    %v1202 = vlaneseq
    %v1203 = vshrl.u32 %v1202, 7
    %v1204 = vsub.s32 0, %v1203
    %v1205 = vrot.slane %v1200, %v1204
    %v1207 = vadd.f32 %v1197, %v1205
    %vm1208 = vcmask 1041408
    %v1209 = vsel %vm1208, %v1207, -inf
    %1210 = vmax.xlane.f32.xlu0 %v1209
    %v1211 = vpop.xlane.xlu0 %1210
    %v1212 = vsub.f32 %v1207, %v1211
    %v1213 = vmul.f32 %v1212, 1.442695
    %v1214 = vpow.pop %v1213
    %v1215 = vsel %vm1208, %v1214, 0.0
    %1216 = vadd.xlane.f32.xlu0 %v1215
    %v1217 = vpop.xlane.xlu0 %1216
    %v1218 = vlog2.pop %v1217
    %v1219 = vmul.f32 %v1218, 0.6931472
    %v1220 = vsub.f32 %v1212, %v1219
    %1221 = vst [vmem:[#allocation8] sm:$0x3] %v1220
    // Predicated region
    $region38: #{forward.1} parent=1 // pred_check
      _
    $region39: #{forward.1} parent=1 // pred_check_branch
      %1223 = sbr.rel (0) target = $region41
    $region40: #{forward.1} parent=1 // pred_region
      %s1225 = ssub.s32 32, 32
      %1226 = vsyncadd [#allocation9], %s1225
      %s1228 = sshll.u32 [#allocation8], 4
      %s1229 = int_to_ptr.vmem [resolvable:$true] %s1228
      %1231 = dma.vmem_to_hbm [thread:$0]  %s1229, 32, %s9, [#allocation9]
    $region41: #{forward.1} parent=1 // pred_fallthru
      _
    // Predicated region
    $region42: #{forward.1} parent=1 // pred_check
      _
    $region43: #{forward.1} parent=1 // pred_check_branch
      %1233 = sbr.rel (0) target = $region45
    $region44: #{forward.1} parent=1 // pred_region
      %1234 = dma.done [#allocation9], 32
    $region45: #{forward.1} parent=1 // pred_fallthru
      _
    %1235 = vsyncpa [#allocation9], 1

</llo_original>
